<compile_context>
chip_gen: v6e
topology: v6e:2x2x1
jax: 0.10.0
libtpu: 0.0.40
codegen_flags: <defaults>
</compile_context>

<pallas_src>
import functools

import jax
import jax.numpy as jnp
from jax.experimental import pallas as pl
from jax.experimental.pallas import tpu as pltpu


def _vmem_spec(shape):
    nd = len(shape)
    return pl.BlockSpec(shape, lambda i, nd=nd: (0,) * nd)


def _smem_spec(shape):
    nd = len(shape)
    return pl.BlockSpec(shape, lambda i, nd=nd: (0,) * nd,
                        memory_space=pltpu.MemorySpace.SMEM)


# --------------------------- fused SimpleCNN kernel ---------------------------
def _simplecnn_kernel(x_ref, dw1k, dw1b, pw1s, pw1b, dw2k, dw2b, pw2w, pw2b,
                      o_ref, pad_ref):
    # x_ref:   (B, 1, H, W)      VMEM input (NCHW)
    # o_ref:   (B, CO, H-2, W-2) VMEM output (NCHW)
    # pad_ref: (B, C, H, W)      VMEM scratch for the padding=1 feature map
    # dw1k(9) dw1b(1) pw1s(C) pw1b(C) dw2k(9C) dw2b(C) pw2w(C*CO) pw2b(CO): SMEM
    B, _, H, W = x_ref.shape
    OH, OW = H - 2, W - 2
    C = pad_ref.shape[1]          # out_size // 2
    CO = o_ref.shape[1]           # out_size

    x = x_ref[...][:, 0]          # (B, H, W)

    # -- depthwise_conv1: 3x3 valid, single channel (shift-and-accumulate, VPU)
    acc1 = jnp.full((B, OH, OW), dw1b[0], jnp.float32)
    for di in range(3):
        for dj in range(3):
            acc1 = acc1 + x[:, di:di + OH, dj:dj + OW] * dw1k[di * 3 + dj]

    # -- pointwise_conv1 (+ folded bn1) + ReLU6: per-channel scalar FMA (no K=1 matmul)
    y1 = jnp.stack(
        [jnp.clip(acc1 * pw1s[c] + pw1b[c], 0.0, 6.0) for c in range(C)],
        axis=1)                                          # (B, C, OH, OW)

    # -- padding=1 for depthwise_conv2, built in VMEM scratch (no HBM round trip)
    pad_ref[...] = jnp.zeros_like(pad_ref)
    pad_ref[:, :, 1:OH + 1, 1:OW + 1] = y1
    xp = pad_ref[...]                                    # (B, C, OH+2, OW+2)

    # -- depthwise_conv2: 3x3, groups=C, padding=1 (shift-and-accumulate per channel)
    y2 = []
    for c in range(C):
        xc = xp[:, c]
        a = jnp.full((B, OH, OW), dw2b[c], jnp.float32)
        for di in range(3):
            for dj in range(3):
                a = a + xc[:, di:di + OH, dj:dj + OW] * dw2k[c * 9 + di * 3 + dj]
        y2.append(a)

    # -- pointwise_conv2 (+ folded bn2) + ReLU6: tiny K=C reduction on the VPU
    outs = []
    for co in range(CO):
        a = jnp.full((B, OH, OW), pw2b[co], jnp.float32)
        for ci in range(C):
            a = a + y2[ci] * pw2w[ci * CO + co]
        outs.append(jnp.clip(a, 0.0, 6.0))
    o_ref[...] = jnp.stack(outs, axis=1)                 # single contiguous NCHW store


def simple_cnn_forward(prep, x):
    """Fused SimpleCNN forward. x: (B, 1, H, W) f32 NCHW -> (B, out_size, H-2, W-2)."""
    B, _, H, W = x.shape
    C = prep["pw1_s"].shape[0]
    CO = prep["pw2_b"].shape[0]
    OH, OW = H - 2, W - 2
    return pl.pallas_call(
        _simplecnn_kernel,
        out_shape=jax.ShapeDtypeStruct((B, CO, OH, OW), jnp.float32),
        grid=(1,),
        in_specs=[
            _vmem_spec((B, 1, H, W)),
            _smem_spec((9,)), _smem_spec((1,)),
            _smem_spec((C,)), _smem_spec((C,)),
            _smem_spec((9 * C,)), _smem_spec((C,)),
            _smem_spec((C * CO,)), _smem_spec((CO,)),
        ],
        out_specs=_vmem_spec((B, CO, OH, OW)),
        scratch_shapes=[pltpu.VMEM((B, C, OH + 2, OW + 2), jnp.float32)],
        compiler_params=pltpu.CompilerParams(dimension_semantics=("arbitrary",)),
    )(x, prep["dw1_k"], prep["dw1_b"], prep["pw1_s"], prep["pw1_b"],
      prep["dw2_k"], prep["dw2_b"], prep["pw2_w"], prep["pw2_b"])


# ------------------------------ parameters ------------------------------
def init_params(key, out_size):
    """PyTorch-shaped parameters (Conv2d OIHW weights, BatchNorm running stats)."""
    c = out_size // 2
    ks = iter(jax.random.split(key, 20))

    def u(k, shape, fan_in):
        b = 1.0 / (fan_in ** 0.5)
        return jax.random.uniform(k, shape, jnp.float32, -b, b)

    p = {}
    p["dw1_w"] = u(next(ks), (1, 1, 3, 3), 9)
    p["dw1_b"] = u(next(ks), (1,), 9)
    p["pw1_w"] = u(next(ks), (c, 1, 1, 1), 1)
    p["pw1_b"] = u(next(ks), (c,), 1)
    p["bn1_gamma"] = 1.0 + 0.1 * jax.random.normal(next(ks), (c,), jnp.float32)
    p["bn1_beta"] = 0.1 * jax.random.normal(next(ks), (c,), jnp.float32)
    p["bn1_mean"] = 0.1 * jax.random.normal(next(ks), (c,), jnp.float32)
    p["bn1_var"] = 1.0 + 0.1 * jax.random.uniform(next(ks), (c,), jnp.float32)
    p["dw2_w"] = u(next(ks), (c, 1, 3, 3), 9)
    p["dw2_b"] = u(next(ks), (c,), 9)
    p["pw2_w"] = u(next(ks), (out_size, c, 1, 1), c)
    p["pw2_b"] = u(next(ks), (out_size,), c)
    p["bn2_gamma"] = 1.0 + 0.1 * jax.random.normal(next(ks), (out_size,), jnp.float32)
    p["bn2_beta"] = 0.1 * jax.random.normal(next(ks), (out_size,), jnp.float32)
    p["bn2_mean"] = 0.1 * jax.random.normal(next(ks), (out_size,), jnp.float32)
    p["bn2_var"] = 1.0 + 0.1 * jax.random.uniform(next(ks), (out_size,), jnp.float32)
    return p


def prepare_params(p, eps=1e-5):
    """Fold eval-mode BatchNorm into the pointwise convs ONCE; flatten to kernel layout."""
    c = p["pw1_w"].shape[0]
    co = p["pw2_w"].shape[0]
    s1 = p["bn1_gamma"] / jnp.sqrt(p["bn1_var"] + eps)
    s2 = p["bn2_gamma"] / jnp.sqrt(p["bn2_var"] + eps)
    pw1_w = p["pw1_w"].reshape(c)                      # (C,1,1,1) -> (C,)
    pw2_w = p["pw2_w"].reshape(co, c)                  # (CO,C,1,1) -> (CO,C)
    return dict(
        dw1_k=p["dw1_w"].reshape(9).astype(jnp.float32),
        dw1_b=p["dw1_b"].reshape(1).astype(jnp.float32),
        pw1_s=(pw1_w * s1).astype(jnp.float32),
        pw1_b=((p["pw1_b"] - p["bn1_mean"]) * s1 + p["bn1_beta"]).astype(jnp.float32),
        dw2_k=p["dw2_w"].reshape(c, 9).reshape(-1).astype(jnp.float32),
        dw2_b=p["dw2_b"].astype(jnp.float32),
        pw2_w=(pw2_w * s2[:, None]).T.reshape(-1).astype(jnp.float32),  # [ci*CO + co]
        pw2_b=((p["pw2_b"] - p["bn2_mean"]) * s2 + p["bn2_beta"]).astype(jnp.float32),
    )


# ------------------------------ reference (pure JAX) ------------------------------
def reference_forward(p, x, eps=1e-5):
    def conv(v, w, b, padding, groups=1):
        y = jax.lax.conv_general_dilated(
            v, w, window_strides=(1, 1), padding=padding,
            dimension_numbers=("NCHW", "OIHW", "NCHW"),
            feature_group_count=groups,
            precision=jax.lax.Precision.HIGHEST)
        return y + b[None, :, None, None]

    def bn(v, g, beta, mean, var):
        s = g / jnp.sqrt(var + eps)
        return (v - mean[None, :, None, None]) * s[None, :, None, None] \
            + beta[None, :, None, None]

    relu6 = lambda v: jnp.clip(v, 0.0, 6.0)
    c = p["pw1_w"].shape[0]
    y = conv(x, p["dw1_w"], p["dw1_b"], "VALID")
    y = conv(y, p["pw1_w"], p["pw1_b"], "VALID")
    y = relu6(bn(y, p["bn1_gamma"], p["bn1_beta"], p["bn1_mean"], p["bn1_var"]))
    y = conv(y, p["dw2_w"], p["dw2_b"], ((1, 1), (1, 1)), groups=c)
    y = conv(y, p["pw2_w"], p["pw2_b"], "VALID")
    y = relu6(bn(y, p["bn2_gamma"], p["bn2_beta"], p["bn2_mean"], p["bn2_var"]))
    return y


if __name__ == "__main__":
    key = jax.random.PRNGKey(0)
    kp, kx = jax.random.split(key)
    B, OUT, H, W = 2, 8, 16, 16          # batch=2, out_size=8 (channels 4->8), spatial 16

    params = init_params(kp, OUT)
    prep = prepare_params(params)        # BN folded once, kernel-ready flat layout
    x = jax.random.normal(kx, (B, 1, H, W), jnp.float32)

    fwd = jax.jit(simple_cnn_forward)
    out = fwd(prep, x)
    jax.block_until_ready(out)
    assert out.shape == (B, OUT, H - 2, W - 2), out.shape

    ref = reference_forward(params, x)
    err = float(jnp.max(jnp.abs(out - ref)))
    assert err < 1e-4, f"max abs err {err}"
    print("KERNEL_OK")
</pallas_src>

<mosaic_0001>
module attributes {stable_mosaic.version = 11 : i64} {
  func.func @_simplecnn_kernel(%arg0: i32, %arg1: memref<2x1x16x16xf32, #tpu.memory_space<vmem>>, %arg2: memref<9xf32, #tpu.memory_space<smem>>, %arg3: memref<1xf32, #tpu.memory_space<smem>>, %arg4: memref<4xf32, #tpu.memory_space<smem>>, %arg5: memref<4xf32, #tpu.memory_space<smem>>, %arg6: memref<36xf32, #tpu.memory_space<smem>>, %arg7: memref<4xf32, #tpu.memory_space<smem>>, %arg8: memref<32xf32, #tpu.memory_space<smem>>, %arg9: memref<8xf32, #tpu.memory_space<smem>>, %arg10: memref<2x8x14x14xf32, #tpu.memory_space<vmem>>, %arg11: memref<2x4x16x16xf32, #tpu.memory_space<vmem>>) attributes {dimension_semantics = [#tpu.dimension_semantics<arbitrary>], iteration_bounds = array<i64: 1>, scalar_prefetch = 0 : i64, scratch_operands = 1 : i64, tpu.core_type = #tpu.core_type<tc>, window_params = [{pipeline_mode = #tpu.pipeline_mode<synchronous>, transform_indices = @transform_0, window_bounds = array<i64: 2, 1, 16, 16>}, {transform_indices = @transform_1, window_bounds = array<i64: 9>}, {transform_indices = @transform_2, window_bounds = array<i64: 1>}, {transform_indices = @transform_3, window_bounds = array<i64: 4>}, {transform_indices = @transform_4, window_bounds = array<i64: 4>}, {transform_indices = @transform_5, window_bounds = array<i64: 36>}, {transform_indices = @transform_6, window_bounds = array<i64: 4>}, {transform_indices = @transform_7, window_bounds = array<i64: 32>}, {transform_indices = @transform_8, window_bounds = array<i64: 8>}, {pipeline_mode = #tpu.pipeline_mode<synchronous>, transform_indices = @transform_9, window_bounds = array<i64: 2, 8, 14, 14>}]} {
    %c0 = arith.constant 0 : index
    %c0_0 = arith.constant 0 : index
    %c0_1 = arith.constant 0 : index
    %c0_2 = arith.constant 0 : index
    %0 = vector.load %arg1[%c0, %c0_0, %c0_1, %c0_2] : memref<2x1x16x16xf32, #tpu.memory_space<vmem>>, vector<2x1x16x16xf32>
    %1 = vector.shape_cast %0 : vector<2x1x16x16xf32> to vector<2x16x16xf32>
    %c0_3 = arith.constant 0 : index
    %2 = memref.load %arg3[%c0_3] : memref<1xf32, #tpu.memory_space<smem>>
    %3 = vector.broadcast %2 : f32 to vector<2x14x14xf32>
    %4 = vector.extract_strided_slice %1 {offsets = [0, 0, 0], sizes = [2, 14, 14], strides = [1, 1, 1]} : vector<2x16x16xf32> to vector<2x14x14xf32>
    %c0_4 = arith.constant 0 : index
    %5 = memref.load %arg2[%c0_4] : memref<9xf32, #tpu.memory_space<smem>>
    %6 = vector.broadcast %5 : f32 to vector<2x14x14xf32>
    %7 = arith.mulf %4, %6 : vector<2x14x14xf32>
    %8 = arith.addf %3, %7 : vector<2x14x14xf32>
    %9 = vector.extract_strided_slice %1 {offsets = [0, 0, 1], sizes = [2, 14, 14], strides = [1, 1, 1]} : vector<2x16x16xf32> to vector<2x14x14xf32>
    %c1 = arith.constant 1 : index
    %10 = memref.load %arg2[%c1] : memref<9xf32, #tpu.memory_space<smem>>
    %11 = vector.broadcast %10 : f32 to vector<2x14x14xf32>
    %12 = arith.mulf %9, %11 : vector<2x14x14xf32>
    %13 = arith.addf %8, %12 : vector<2x14x14xf32>
    %14 = vector.extract_strided_slice %1 {offsets = [0, 0, 2], sizes = [2, 14, 14], strides = [1, 1, 1]} : vector<2x16x16xf32> to vector<2x14x14xf32>
    %c2 = arith.constant 2 : index
    %15 = memref.load %arg2[%c2] : memref<9xf32, #tpu.memory_space<smem>>
    %16 = vector.broadcast %15 : f32 to vector<2x14x14xf32>
    %17 = arith.mulf %14, %16 : vector<2x14x14xf32>
    %18 = arith.addf %13, %17 : vector<2x14x14xf32>
    %19 = vector.extract_strided_slice %1 {offsets = [0, 1, 0], sizes = [2, 14, 14], strides = [1, 1, 1]} : vector<2x16x16xf32> to vector<2x14x14xf32>
    %c3 = arith.constant 3 : index
    %20 = memref.load %arg2[%c3] : memref<9xf32, #tpu.memory_space<smem>>
    %21 = vector.broadcast %20 : f32 to vector<2x14x14xf32>
    %22 = arith.mulf %19, %21 : vector<2x14x14xf32>
    %23 = arith.addf %18, %22 : vector<2x14x14xf32>
    %24 = vector.extract_strided_slice %1 {offsets = [0, 1, 1], sizes = [2, 14, 14], strides = [1, 1, 1]} : vector<2x16x16xf32> to vector<2x14x14xf32>
    %c4 = arith.constant 4 : index
    %25 = memref.load %arg2[%c4] : memref<9xf32, #tpu.memory_space<smem>>
    %26 = vector.broadcast %25 : f32 to vector<2x14x14xf32>
    %27 = arith.mulf %24, %26 : vector<2x14x14xf32>
    %28 = arith.addf %23, %27 : vector<2x14x14xf32>
    %29 = vector.extract_strided_slice %1 {offsets = [0, 1, 2], sizes = [2, 14, 14], strides = [1, 1, 1]} : vector<2x16x16xf32> to vector<2x14x14xf32>
    %c5 = arith.constant 5 : index
    %30 = memref.load %arg2[%c5] : memref<9xf32, #tpu.memory_space<smem>>
    %31 = vector.broadcast %30 : f32 to vector<2x14x14xf32>
    %32 = arith.mulf %29, %31 : vector<2x14x14xf32>
    %33 = arith.addf %28, %32 : vector<2x14x14xf32>
    %34 = vector.extract_strided_slice %1 {offsets = [0, 2, 0], sizes = [2, 14, 14], strides = [1, 1, 1]} : vector<2x16x16xf32> to vector<2x14x14xf32>
    %c6 = arith.constant 6 : index
    %35 = memref.load %arg2[%c6] : memref<9xf32, #tpu.memory_space<smem>>
    %36 = vector.broadcast %35 : f32 to vector<2x14x14xf32>
    %37 = arith.mulf %34, %36 : vector<2x14x14xf32>
    %38 = arith.addf %33, %37 : vector<2x14x14xf32>
    %39 = vector.extract_strided_slice %1 {offsets = [0, 2, 1], sizes = [2, 14, 14], strides = [1, 1, 1]} : vector<2x16x16xf32> to vector<2x14x14xf32>
    %c7 = arith.constant 7 : index
    %40 = memref.load %arg2[%c7] : memref<9xf32, #tpu.memory_space<smem>>
    %41 = vector.broadcast %40 : f32 to vector<2x14x14xf32>
    %42 = arith.mulf %39, %41 : vector<2x14x14xf32>
    %43 = arith.addf %38, %42 : vector<2x14x14xf32>
    %44 = vector.extract_strided_slice %1 {offsets = [0, 2, 2], sizes = [2, 14, 14], strides = [1, 1, 1]} : vector<2x16x16xf32> to vector<2x14x14xf32>
    %c8 = arith.constant 8 : index
    %45 = memref.load %arg2[%c8] : memref<9xf32, #tpu.memory_space<smem>>
    %46 = vector.broadcast %45 : f32 to vector<2x14x14xf32>
    %47 = arith.mulf %44, %46 : vector<2x14x14xf32>
    %48 = arith.addf %43, %47 : vector<2x14x14xf32>
    %c0_5 = arith.constant 0 : index
    %49 = memref.load %arg4[%c0_5] : memref<4xf32, #tpu.memory_space<smem>>
    %50 = vector.broadcast %49 : f32 to vector<2x14x14xf32>
    %51 = arith.mulf %48, %50 : vector<2x14x14xf32>
    %c0_6 = arith.constant 0 : index
    %52 = memref.load %arg5[%c0_6] : memref<4xf32, #tpu.memory_space<smem>>
    %53 = vector.broadcast %52 : f32 to vector<2x14x14xf32>
    %54 = arith.addf %51, %53 : vector<2x14x14xf32>
    %cst = arith.constant 0.000000e+00 : f32
    %cst_7 = arith.constant 6.000000e+00 : f32
    %55 = vector.broadcast %cst : f32 to vector<2x14x14xf32>
    %56 = arith.maximumf %55, %54 : vector<2x14x14xf32>
    %57 = vector.broadcast %cst_7 : f32 to vector<2x14x14xf32>
    %58 = arith.minimumf %57, %56 : vector<2x14x14xf32>
    %c1_8 = arith.constant 1 : index
    %59 = memref.load %arg4[%c1_8] : memref<4xf32, #tpu.memory_space<smem>>
    %60 = vector.broadcast %59 : f32 to vector<2x14x14xf32>
    %61 = arith.mulf %48, %60 : vector<2x14x14xf32>
    %c1_9 = arith.constant 1 : index
    %62 = memref.load %arg5[%c1_9] : memref<4xf32, #tpu.memory_space<smem>>
    %63 = vector.broadcast %62 : f32 to vector<2x14x14xf32>
    %64 = arith.addf %61, %63 : vector<2x14x14xf32>
    %cst_10 = arith.constant 0.000000e+00 : f32
    %cst_11 = arith.constant 6.000000e+00 : f32
    %65 = vector.broadcast %cst_10 : f32 to vector<2x14x14xf32>
    %66 = arith.maximumf %65, %64 : vector<2x14x14xf32>
    %67 = vector.broadcast %cst_11 : f32 to vector<2x14x14xf32>
    %68 = arith.minimumf %67, %66 : vector<2x14x14xf32>
    %c2_12 = arith.constant 2 : index
    %69 = memref.load %arg4[%c2_12] : memref<4xf32, #tpu.memory_space<smem>>
    %70 = vector.broadcast %69 : f32 to vector<2x14x14xf32>
    %71 = arith.mulf %48, %70 : vector<2x14x14xf32>
    %c2_13 = arith.constant 2 : index
    %72 = memref.load %arg5[%c2_13] : memref<4xf32, #tpu.memory_space<smem>>
    %73 = vector.broadcast %72 : f32 to vector<2x14x14xf32>
    %74 = arith.addf %71, %73 : vector<2x14x14xf32>
    %cst_14 = arith.constant 0.000000e+00 : f32
    %cst_15 = arith.constant 6.000000e+00 : f32
    %75 = vector.broadcast %cst_14 : f32 to vector<2x14x14xf32>
    %76 = arith.maximumf %75, %74 : vector<2x14x14xf32>
    %77 = vector.broadcast %cst_15 : f32 to vector<2x14x14xf32>
    %78 = arith.minimumf %77, %76 : vector<2x14x14xf32>
    %c3_16 = arith.constant 3 : index
    %79 = memref.load %arg4[%c3_16] : memref<4xf32, #tpu.memory_space<smem>>
    %80 = vector.broadcast %79 : f32 to vector<2x14x14xf32>
    %81 = arith.mulf %48, %80 : vector<2x14x14xf32>
    %c3_17 = arith.constant 3 : index
    %82 = memref.load %arg5[%c3_17] : memref<4xf32, #tpu.memory_space<smem>>
    %83 = vector.broadcast %82 : f32 to vector<2x14x14xf32>
    %84 = arith.addf %81, %83 : vector<2x14x14xf32>
    %cst_18 = arith.constant 0.000000e+00 : f32
    %cst_19 = arith.constant 6.000000e+00 : f32
    %85 = vector.broadcast %cst_18 : f32 to vector<2x14x14xf32>
    %86 = arith.maximumf %85, %84 : vector<2x14x14xf32>
    %87 = vector.broadcast %cst_19 : f32 to vector<2x14x14xf32>
    %88 = arith.minimumf %87, %86 : vector<2x14x14xf32>
    %89 = vector.shape_cast %58 : vector<2x14x14xf32> to vector<2x1x14x14xf32>
    %90 = vector.shape_cast %68 : vector<2x14x14xf32> to vector<2x1x14x14xf32>
    %91 = vector.shape_cast %78 : vector<2x14x14xf32> to vector<2x1x14x14xf32>
    %92 = vector.shape_cast %88 : vector<2x14x14xf32> to vector<2x1x14x14xf32>
    %93 = tpu.concatenate %89, %90, %91, %92 in 1 : vector<2x1x14x14xf32>, vector<2x1x14x14xf32>, vector<2x1x14x14xf32>, vector<2x1x14x14xf32> -> vector<2x4x14x14xf32>
    %cst_20 = arith.constant 0.000000e+00 : f32
    %94 = vector.broadcast %cst_20 : f32 to vector<2x4x16x16xf32>
    %c0_21 = arith.constant 0 : index
    %c0_22 = arith.constant 0 : index
    %c0_23 = arith.constant 0 : index
    %c0_24 = arith.constant 0 : index
    %95 = vector.load %arg11[%c0_21, %c0_22, %c0_23, %c0_24] : memref<2x4x16x16xf32, #tpu.memory_space<vmem>>, vector<2x4x16x16xf32>
    tpu.vector_store %arg11[%c0_21, %c0_22, %c0_23, %c0_24], %94 {strides = array<i32>} : memref<2x4x16x16xf32, #tpu.memory_space<vmem>>, vector<2x4x16x16xf32>,
    %c0_25 = arith.constant 0 : index
    %c0_26 = arith.constant 0 : index
    %c1_27 = arith.constant 1 : index
    %c1_28 = arith.constant 1 : index
    %96 = vector.load %arg11[%c0_25, %c0_26, %c1_27, %c1_28] : memref<2x4x16x16xf32, #tpu.memory_space<vmem>>, vector<2x4x14x14xf32>
    tpu.vector_store %arg11[%c0_25, %c0_26, %c1_27, %c1_28], %93 {strides = array<i32>} : memref<2x4x16x16xf32, #tpu.memory_space<vmem>>, vector<2x4x14x14xf32>,
    %c0_29 = arith.constant 0 : index
    %c0_30 = arith.constant 0 : index
    %c0_31 = arith.constant 0 : index
    %c0_32 = arith.constant 0 : index
    %97 = vector.load %arg11[%c0_29, %c0_30, %c0_31, %c0_32] : memref<2x4x16x16xf32, #tpu.memory_space<vmem>>, vector<2x4x16x16xf32>
    %98 = vector.extract_strided_slice %97 {offsets = [0, 0, 0, 0], sizes = [2, 1, 16, 16], strides = [1, 1, 1, 1]} : vector<2x4x16x16xf32> to vector<2x1x16x16xf32>
    %99 = vector.shape_cast %98 : vector<2x1x16x16xf32> to vector<2x16x16xf32>
    %c0_33 = arith.constant 0 : index
    %100 = memref.load %arg7[%c0_33] : memref<4xf32, #tpu.memory_space<smem>>
    %101 = vector.broadcast %100 : f32 to vector<2x14x14xf32>
    %102 = vector.extract_strided_slice %99 {offsets = [0, 0, 0], sizes = [2, 14, 14], strides = [1, 1, 1]} : vector<2x16x16xf32> to vector<2x14x14xf32>
    %c0_34 = arith.constant 0 : index
    %103 = memref.load %arg6[%c0_34] : memref<36xf32, #tpu.memory_space<smem>>
    %104 = vector.broadcast %103 : f32 to vector<2x14x14xf32>
    %105 = arith.mulf %102, %104 : vector<2x14x14xf32>
    %106 = arith.addf %101, %105 : vector<2x14x14xf32>
    %107 = vector.extract_strided_slice %99 {offsets = [0, 0, 1], sizes = [2, 14, 14], strides = [1, 1, 1]} : vector<2x16x16xf32> to vector<2x14x14xf32>
    %c1_35 = arith.constant 1 : index
    %108 = memref.load %arg6[%c1_35] : memref<36xf32, #tpu.memory_space<smem>>
    %109 = vector.broadcast %108 : f32 to vector<2x14x14xf32>
    %110 = arith.mulf %107, %109 : vector<2x14x14xf32>
    %111 = arith.addf %106, %110 : vector<2x14x14xf32>
    %112 = vector.extract_strided_slice %99 {offsets = [0, 0, 2], sizes = [2, 14, 14], strides = [1, 1, 1]} : vector<2x16x16xf32> to vector<2x14x14xf32>
    %c2_36 = arith.constant 2 : index
    %113 = memref.load %arg6[%c2_36] : memref<36xf32, #tpu.memory_space<smem>>
    %114 = vector.broadcast %113 : f32 to vector<2x14x14xf32>
    %115 = arith.mulf %112, %114 : vector<2x14x14xf32>
    %116 = arith.addf %111, %115 : vector<2x14x14xf32>
    %117 = vector.extract_strided_slice %99 {offsets = [0, 1, 0], sizes = [2, 14, 14], strides = [1, 1, 1]} : vector<2x16x16xf32> to vector<2x14x14xf32>
    %c3_37 = arith.constant 3 : index
    %118 = memref.load %arg6[%c3_37] : memref<36xf32, #tpu.memory_space<smem>>
    %119 = vector.broadcast %118 : f32 to vector<2x14x14xf32>
    %120 = arith.mulf %117, %119 : vector<2x14x14xf32>
    %121 = arith.addf %116, %120 : vector<2x14x14xf32>
    %122 = vector.extract_strided_slice %99 {offsets = [0, 1, 1], sizes = [2, 14, 14], strides = [1, 1, 1]} : vector<2x16x16xf32> to vector<2x14x14xf32>
    %c4_38 = arith.constant 4 : index
    %123 = memref.load %arg6[%c4_38] : memref<36xf32, #tpu.memory_space<smem>>
    %124 = vector.broadcast %123 : f32 to vector<2x14x14xf32>
    %125 = arith.mulf %122, %124 : vector<2x14x14xf32>
    %126 = arith.addf %121, %125 : vector<2x14x14xf32>
    %127 = vector.extract_strided_slice %99 {offsets = [0, 1, 2], sizes = [2, 14, 14], strides = [1, 1, 1]} : vector<2x16x16xf32> to vector<2x14x14xf32>
    %c5_39 = arith.constant 5 : index
    %128 = memref.load %arg6[%c5_39] : memref<36xf32, #tpu.memory_space<smem>>
    %129 = vector.broadcast %128 : f32 to vector<2x14x14xf32>
    %130 = arith.mulf %127, %129 : vector<2x14x14xf32>
    %131 = arith.addf %126, %130 : vector<2x14x14xf32>
    %132 = vector.extract_strided_slice %99 {offsets = [0, 2, 0], sizes = [2, 14, 14], strides = [1, 1, 1]} : vector<2x16x16xf32> to vector<2x14x14xf32>
    %c6_40 = arith.constant 6 : index
    %133 = memref.load %arg6[%c6_40] : memref<36xf32, #tpu.memory_space<smem>>
    %134 = vector.broadcast %133 : f32 to vector<2x14x14xf32>
    %135 = arith.mulf %132, %134 : vector<2x14x14xf32>
    %136 = arith.addf %131, %135 : vector<2x14x14xf32>
    %137 = vector.extract_strided_slice %99 {offsets = [0, 2, 1], sizes = [2, 14, 14], strides = [1, 1, 1]} : vector<2x16x16xf32> to vector<2x14x14xf32>
    %c7_41 = arith.constant 7 : index
    %138 = memref.load %arg6[%c7_41] : memref<36xf32, #tpu.memory_space<smem>>
    %139 = vector.broadcast %138 : f32 to vector<2x14x14xf32>
    %140 = arith.mulf %137, %139 : vector<2x14x14xf32>
    %141 = arith.addf %136, %140 : vector<2x14x14xf32>
    %142 = vector.extract_strided_slice %99 {offsets = [0, 2, 2], sizes = [2, 14, 14], strides = [1, 1, 1]} : vector<2x16x16xf32> to vector<2x14x14xf32>
    %c8_42 = arith.constant 8 : index
    %143 = memref.load %arg6[%c8_42] : memref<36xf32, #tpu.memory_space<smem>>
    %144 = vector.broadcast %143 : f32 to vector<2x14x14xf32>
    %145 = arith.mulf %142, %144 : vector<2x14x14xf32>
    %146 = arith.addf %141, %145 : vector<2x14x14xf32>
    %147 = vector.extract_strided_slice %97 {offsets = [0, 1, 0, 0], sizes = [2, 1, 16, 16], strides = [1, 1, 1, 1]} : vector<2x4x16x16xf32> to vector<2x1x16x16xf32>
    %148 = vector.shape_cast %147 : vector<2x1x16x16xf32> to vector<2x16x16xf32>
    %c1_43 = arith.constant 1 : index
    %149 = memref.load %arg7[%c1_43] : memref<4xf32, #tpu.memory_space<smem>>
    %150 = vector.broadcast %149 : f32 to vector<2x14x14xf32>
    %151 = vector.extract_strided_slice %148 {offsets = [0, 0, 0], sizes = [2, 14, 14], strides = [1, 1, 1]} : vector<2x16x16xf32> to vector<2x14x14xf32>
    %c9 = arith.constant 9 : index
    %152 = memref.load %arg6[%c9] : memref<36xf32, #tpu.memory_space<smem>>
    %153 = vector.broadcast %152 : f32 to vector<2x14x14xf32>
    %154 = arith.mulf %151, %153 : vector<2x14x14xf32>
    %155 = arith.addf %150, %154 : vector<2x14x14xf32>
    %156 = vector.extract_strided_slice %148 {offsets = [0, 0, 1], sizes = [2, 14, 14], strides = [1, 1, 1]} : vector<2x16x16xf32> to vector<2x14x14xf32>
    %c10 = arith.constant 10 : index
    %157 = memref.load %arg6[%c10] : memref<36xf32, #tpu.memory_space<smem>>
    %158 = vector.broadcast %157 : f32 to vector<2x14x14xf32>
    %159 = arith.mulf %156, %158 : vector<2x14x14xf32>
    %160 = arith.addf %155, %159 : vector<2x14x14xf32>
    %161 = vector.extract_strided_slice %148 {offsets = [0, 0, 2], sizes = [2, 14, 14], strides = [1, 1, 1]} : vector<2x16x16xf32> to vector<2x14x14xf32>
    %c11 = arith.constant 11 : index
    %162 = memref.load %arg6[%c11] : memref<36xf32, #tpu.memory_space<smem>>
    %163 = vector.broadcast %162 : f32 to vector<2x14x14xf32>
    %164 = arith.mulf %161, %163 : vector<2x14x14xf32>
    %165 = arith.addf %160, %164 : vector<2x14x14xf32>
    %166 = vector.extract_strided_slice %148 {offsets = [0, 1, 0], sizes = [2, 14, 14], strides = [1, 1, 1]} : vector<2x16x16xf32> to vector<2x14x14xf32>
    %c12 = arith.constant 12 : index
    %167 = memref.load %arg6[%c12] : memref<36xf32, #tpu.memory_space<smem>>
    %168 = vector.broadcast %167 : f32 to vector<2x14x14xf32>
    %169 = arith.mulf %166, %168 : vector<2x14x14xf32>
    %170 = arith.addf %165, %169 : vector<2x14x14xf32>
    %171 = vector.extract_strided_slice %148 {offsets = [0, 1, 1], sizes = [2, 14, 14], strides = [1, 1, 1]} : vector<2x16x16xf32> to vector<2x14x14xf32>
    %c13 = arith.constant 13 : index
    %172 = memref.load %arg6[%c13] : memref<36xf32, #tpu.memory_space<smem>>
    %173 = vector.broadcast %172 : f32 to vector<2x14x14xf32>
    %174 = arith.mulf %171, %173 : vector<2x14x14xf32>
    %175 = arith.addf %170, %174 : vector<2x14x14xf32>
    %176 = vector.extract_strided_slice %148 {offsets = [0, 1, 2], sizes = [2, 14, 14], strides = [1, 1, 1]} : vector<2x16x16xf32> to vector<2x14x14xf32>
    %c14 = arith.constant 14 : index
    %177 = memref.load %arg6[%c14] : memref<36xf32, #tpu.memory_space<smem>>
    %178 = vector.broadcast %177 : f32 to vector<2x14x14xf32>
    %179 = arith.mulf %176, %178 : vector<2x14x14xf32>
    %180 = arith.addf %175, %179 : vector<2x14x14xf32>
    %181 = vector.extract_strided_slice %148 {offsets = [0, 2, 0], sizes = [2, 14, 14], strides = [1, 1, 1]} : vector<2x16x16xf32> to vector<2x14x14xf32>
    %c15 = arith.constant 15 : index
    %182 = memref.load %arg6[%c15] : memref<36xf32, #tpu.memory_space<smem>>
    %183 = vector.broadcast %182 : f32 to vector<2x14x14xf32>
    %184 = arith.mulf %181, %183 : vector<2x14x14xf32>
    %185 = arith.addf %180, %184 : vector<2x14x14xf32>
    %186 = vector.extract_strided_slice %148 {offsets = [0, 2, 1], sizes = [2, 14, 14], strides = [1, 1, 1]} : vector<2x16x16xf32> to vector<2x14x14xf32>
    %c16 = arith.constant 16 : index
    %187 = memref.load %arg6[%c16] : memref<36xf32, #tpu.memory_space<smem>>
    %188 = vector.broadcast %187 : f32 to vector<2x14x14xf32>
    %189 = arith.mulf %186, %188 : vector<2x14x14xf32>
    %190 = arith.addf %185, %189 : vector<2x14x14xf32>
    %191 = vector.extract_strided_slice %148 {offsets = [0, 2, 2], sizes = [2, 14, 14], strides = [1, 1, 1]} : vector<2x16x16xf32> to vector<2x14x14xf32>
    %c17 = arith.constant 17 : index
    %192 = memref.load %arg6[%c17] : memref<36xf32, #tpu.memory_space<smem>>
    %193 = vector.broadcast %192 : f32 to vector<2x14x14xf32>
    %194 = arith.mulf %191, %193 : vector<2x14x14xf32>
    %195 = arith.addf %190, %194 : vector<2x14x14xf32>
    %196 = vector.extract_strided_slice %97 {offsets = [0, 2, 0, 0], sizes = [2, 1, 16, 16], strides = [1, 1, 1, 1]} : vector<2x4x16x16xf32> to vector<2x1x16x16xf32>
    %197 = vector.shape_cast %196 : vector<2x1x16x16xf32> to vector<2x16x16xf32>
    %c2_44 = arith.constant 2 : index
    %198 = memref.load %arg7[%c2_44] : memref<4xf32, #tpu.memory_space<smem>>
    %199 = vector.broadcast %198 : f32 to vector<2x14x14xf32>
    %200 = vector.extract_strided_slice %197 {offsets = [0, 0, 0], sizes = [2, 14, 14], strides = [1, 1, 1]} : vector<2x16x16xf32> to vector<2x14x14xf32>
    %c18 = arith.constant 18 : index
    %201 = memref.load %arg6[%c18] : memref<36xf32, #tpu.memory_space<smem>>
    %202 = vector.broadcast %201 : f32 to vector<2x14x14xf32>
    %203 = arith.mulf %200, %202 : vector<2x14x14xf32>
    %204 = arith.addf %199, %203 : vector<2x14x14xf32>
    %205 = vector.extract_strided_slice %197 {offsets = [0, 0, 1], sizes = [2, 14, 14], strides = [1, 1, 1]} : vector<2x16x16xf32> to vector<2x14x14xf32>
    %c19 = arith.constant 19 : index
    %206 = memref.load %arg6[%c19] : memref<36xf32, #tpu.memory_space<smem>>
    %207 = vector.broadcast %206 : f32 to vector<2x14x14xf32>
    %208 = arith.mulf %205, %207 : vector<2x14x14xf32>
    %209 = arith.addf %204, %208 : vector<2x14x14xf32>
    %210 = vector.extract_strided_slice %197 {offsets = [0, 0, 2], sizes = [2, 14, 14], strides = [1, 1, 1]} : vector<2x16x16xf32> to vector<2x14x14xf32>
    %c20 = arith.constant 20 : index
    %211 = memref.load %arg6[%c20] : memref<36xf32, #tpu.memory_space<smem>>
    %212 = vector.broadcast %211 : f32 to vector<2x14x14xf32>
    %213 = arith.mulf %210, %212 : vector<2x14x14xf32>
    %214 = arith.addf %209, %213 : vector<2x14x14xf32>
    %215 = vector.extract_strided_slice %197 {offsets = [0, 1, 0], sizes = [2, 14, 14], strides = [1, 1, 1]} : vector<2x16x16xf32> to vector<2x14x14xf32>
    %c21 = arith.constant 21 : index
    %216 = memref.load %arg6[%c21] : memref<36xf32, #tpu.memory_space<smem>>
    %217 = vector.broadcast %216 : f32 to vector<2x14x14xf32>
    %218 = arith.mulf %215, %217 : vector<2x14x14xf32>
    %219 = arith.addf %214, %218 : vector<2x14x14xf32>
    %220 = vector.extract_strided_slice %197 {offsets = [0, 1, 1], sizes = [2, 14, 14], strides = [1, 1, 1]} : vector<2x16x16xf32> to vector<2x14x14xf32>
    %c22 = arith.constant 22 : index
    %221 = memref.load %arg6[%c22] : memref<36xf32, #tpu.memory_space<smem>>
    %222 = vector.broadcast %221 : f32 to vector<2x14x14xf32>
    %223 = arith.mulf %220, %222 : vector<2x14x14xf32>
    %224 = arith.addf %219, %223 : vector<2x14x14xf32>
    %225 = vector.extract_strided_slice %197 {offsets = [0, 1, 2], sizes = [2, 14, 14], strides = [1, 1, 1]} : vector<2x16x16xf32> to vector<2x14x14xf32>
    %c23 = arith.constant 23 : index
    %226 = memref.load %arg6[%c23] : memref<36xf32, #tpu.memory_space<smem>>
    %227 = vector.broadcast %226 : f32 to vector<2x14x14xf32>
    %228 = arith.mulf %225, %227 : vector<2x14x14xf32>
    %229 = arith.addf %224, %228 : vector<2x14x14xf32>
    %230 = vector.extract_strided_slice %197 {offsets = [0, 2, 0], sizes = [2, 14, 14], strides = [1, 1, 1]} : vector<2x16x16xf32> to vector<2x14x14xf32>
    %c24 = arith.constant 24 : index
    %231 = memref.load %arg6[%c24] : memref<36xf32, #tpu.memory_space<smem>>
    %232 = vector.broadcast %231 : f32 to vector<2x14x14xf32>
    %233 = arith.mulf %230, %232 : vector<2x14x14xf32>
    %234 = arith.addf %229, %233 : vector<2x14x14xf32>
    %235 = vector.extract_strided_slice %197 {offsets = [0, 2, 1], sizes = [2, 14, 14], strides = [1, 1, 1]} : vector<2x16x16xf32> to vector<2x14x14xf32>
    %c25 = arith.constant 25 : index
    %236 = memref.load %arg6[%c25] : memref<36xf32, #tpu.memory_space<smem>>
    %237 = vector.broadcast %236 : f32 to vector<2x14x14xf32>
    %238 = arith.mulf %235, %237 : vector<2x14x14xf32>
    %239 = arith.addf %234, %238 : vector<2x14x14xf32>
    %240 = vector.extract_strided_slice %197 {offsets = [0, 2, 2], sizes = [2, 14, 14], strides = [1, 1, 1]} : vector<2x16x16xf32> to vector<2x14x14xf32>
    %c26 = arith.constant 26 : index
    %241 = memref.load %arg6[%c26] : memref<36xf32, #tpu.memory_space<smem>>
    %242 = vector.broadcast %241 : f32 to vector<2x14x14xf32>
    %243 = arith.mulf %240, %242 : vector<2x14x14xf32>
    %244 = arith.addf %239, %243 : vector<2x14x14xf32>
    %245 = vector.extract_strided_slice %97 {offsets = [0, 3, 0, 0], sizes = [2, 1, 16, 16], strides = [1, 1, 1, 1]} : vector<2x4x16x16xf32> to vector<2x1x16x16xf32>
    %246 = vector.shape_cast %245 : vector<2x1x16x16xf32> to vector<2x16x16xf32>
    %c3_45 = arith.constant 3 : index
    %247 = memref.load %arg7[%c3_45] : memref<4xf32, #tpu.memory_space<smem>>
    %248 = vector.broadcast %247 : f32 to vector<2x14x14xf32>
    %249 = vector.extract_strided_slice %246 {offsets = [0, 0, 0], sizes = [2, 14, 14], strides = [1, 1, 1]} : vector<2x16x16xf32> to vector<2x14x14xf32>
    %c27 = arith.constant 27 : index
    %250 = memref.load %arg6[%c27] : memref<36xf32, #tpu.memory_space<smem>>
    %251 = vector.broadcast %250 : f32 to vector<2x14x14xf32>
    %252 = arith.mulf %249, %251 : vector<2x14x14xf32>
    %253 = arith.addf %248, %252 : vector<2x14x14xf32>
    %254 = vector.extract_strided_slice %246 {offsets = [0, 0, 1], sizes = [2, 14, 14], strides = [1, 1, 1]} : vector<2x16x16xf32> to vector<2x14x14xf32>
    %c28 = arith.constant 28 : index
    %255 = memref.load %arg6[%c28] : memref<36xf32, #tpu.memory_space<smem>>
    %256 = vector.broadcast %255 : f32 to vector<2x14x14xf32>
    %257 = arith.mulf %254, %256 : vector<2x14x14xf32>
    %258 = arith.addf %253, %257 : vector<2x14x14xf32>
    %259 = vector.extract_strided_slice %246 {offsets = [0, 0, 2], sizes = [2, 14, 14], strides = [1, 1, 1]} : vector<2x16x16xf32> to vector<2x14x14xf32>
    %c29 = arith.constant 29 : index
    %260 = memref.load %arg6[%c29] : memref<36xf32, #tpu.memory_space<smem>>
    %261 = vector.broadcast %260 : f32 to vector<2x14x14xf32>
    %262 = arith.mulf %259, %261 : vector<2x14x14xf32>
    %263 = arith.addf %258, %262 : vector<2x14x14xf32>
    %264 = vector.extract_strided_slice %246 {offsets = [0, 1, 0], sizes = [2, 14, 14], strides = [1, 1, 1]} : vector<2x16x16xf32> to vector<2x14x14xf32>
    %c30 = arith.constant 30 : index
    %265 = memref.load %arg6[%c30] : memref<36xf32, #tpu.memory_space<smem>>
    %266 = vector.broadcast %265 : f32 to vector<2x14x14xf32>
    %267 = arith.mulf %264, %266 : vector<2x14x14xf32>
    %268 = arith.addf %263, %267 : vector<2x14x14xf32>
    %269 = vector.extract_strided_slice %246 {offsets = [0, 1, 1], sizes = [2, 14, 14], strides = [1, 1, 1]} : vector<2x16x16xf32> to vector<2x14x14xf32>
    %c31 = arith.constant 31 : index
    %270 = memref.load %arg6[%c31] : memref<36xf32, #tpu.memory_space<smem>>
    %271 = vector.broadcast %270 : f32 to vector<2x14x14xf32>
    %272 = arith.mulf %269, %271 : vector<2x14x14xf32>
    %273 = arith.addf %268, %272 : vector<2x14x14xf32>
    %274 = vector.extract_strided_slice %246 {offsets = [0, 1, 2], sizes = [2, 14, 14], strides = [1, 1, 1]} : vector<2x16x16xf32> to vector<2x14x14xf32>
    %c32 = arith.constant 32 : index
    %275 = memref.load %arg6[%c32] : memref<36xf32, #tpu.memory_space<smem>>
    %276 = vector.broadcast %275 : f32 to vector<2x14x14xf32>
    %277 = arith.mulf %274, %276 : vector<2x14x14xf32>
    %278 = arith.addf %273, %277 : vector<2x14x14xf32>
    %279 = vector.extract_strided_slice %246 {offsets = [0, 2, 0], sizes = [2, 14, 14], strides = [1, 1, 1]} : vector<2x16x16xf32> to vector<2x14x14xf32>
    %c33 = arith.constant 33 : index
    %280 = memref.load %arg6[%c33] : memref<36xf32, #tpu.memory_space<smem>>
    %281 = vector.broadcast %280 : f32 to vector<2x14x14xf32>
    %282 = arith.mulf %279, %281 : vector<2x14x14xf32>
    %283 = arith.addf %278, %282 : vector<2x14x14xf32>
    %284 = vector.extract_strided_slice %246 {offsets = [0, 2, 1], sizes = [2, 14, 14], strides = [1, 1, 1]} : vector<2x16x16xf32> to vector<2x14x14xf32>
    %c34 = arith.constant 34 : index
    %285 = memref.load %arg6[%c34] : memref<36xf32, #tpu.memory_space<smem>>
    %286 = vector.broadcast %285 : f32 to vector<2x14x14xf32>
    %287 = arith.mulf %284, %286 : vector<2x14x14xf32>
    %288 = arith.addf %283, %287 : vector<2x14x14xf32>
    %289 = vector.extract_strided_slice %246 {offsets = [0, 2, 2], sizes = [2, 14, 14], strides = [1, 1, 1]} : vector<2x16x16xf32> to vector<2x14x14xf32>
    %c35 = arith.constant 35 : index
    %290 = memref.load %arg6[%c35] : memref<36xf32, #tpu.memory_space<smem>>
    %291 = vector.broadcast %290 : f32 to vector<2x14x14xf32>
    %292 = arith.mulf %289, %291 : vector<2x14x14xf32>
    %293 = arith.addf %288, %292 : vector<2x14x14xf32>
    %c0_46 = arith.constant 0 : index
    %294 = memref.load %arg9[%c0_46] : memref<8xf32, #tpu.memory_space<smem>>
    %295 = vector.broadcast %294 : f32 to vector<2x14x14xf32>
    %c0_47 = arith.constant 0 : index
    %296 = memref.load %arg8[%c0_47] : memref<32xf32, #tpu.memory_space<smem>>
    %297 = vector.broadcast %296 : f32 to vector<2x14x14xf32>
    %298 = arith.mulf %146, %297 : vector<2x14x14xf32>
    %299 = arith.addf %295, %298 : vector<2x14x14xf32>
    %c8_48 = arith.constant 8 : index
    %300 = memref.load %arg8[%c8_48] : memref<32xf32, #tpu.memory_space<smem>>
    %301 = vector.broadcast %300 : f32 to vector<2x14x14xf32>
    %302 = arith.mulf %195, %301 : vector<2x14x14xf32>
    %303 = arith.addf %299, %302 : vector<2x14x14xf32>
    %c16_49 = arith.constant 16 : index
    %304 = memref.load %arg8[%c16_49] : memref<32xf32, #tpu.memory_space<smem>>
    %305 = vector.broadcast %304 : f32 to vector<2x14x14xf32>
    %306 = arith.mulf %244, %305 : vector<2x14x14xf32>
    %307 = arith.addf %303, %306 : vector<2x14x14xf32>
    %c24_50 = arith.constant 24 : index
    %308 = memref.load %arg8[%c24_50] : memref<32xf32, #tpu.memory_space<smem>>
    %309 = vector.broadcast %308 : f32 to vector<2x14x14xf32>
    %310 = arith.mulf %293, %309 : vector<2x14x14xf32>
    %311 = arith.addf %307, %310 : vector<2x14x14xf32>
    %cst_51 = arith.constant 0.000000e+00 : f32
    %cst_52 = arith.constant 6.000000e+00 : f32
    %312 = vector.broadcast %cst_51 : f32 to vector<2x14x14xf32>
    %313 = arith.maximumf %312, %311 : vector<2x14x14xf32>
    %314 = vector.broadcast %cst_52 : f32 to vector<2x14x14xf32>
    %315 = arith.minimumf %314, %313 : vector<2x14x14xf32>
    %c1_53 = arith.constant 1 : index
    %316 = memref.load %arg9[%c1_53] : memref<8xf32, #tpu.memory_space<smem>>
    %317 = vector.broadcast %316 : f32 to vector<2x14x14xf32>
    %c1_54 = arith.constant 1 : index
    %318 = memref.load %arg8[%c1_54] : memref<32xf32, #tpu.memory_space<smem>>
    %319 = vector.broadcast %318 : f32 to vector<2x14x14xf32>
    %320 = arith.mulf %146, %319 : vector<2x14x14xf32>
    %321 = arith.addf %317, %320 : vector<2x14x14xf32>
    %c9_55 = arith.constant 9 : index
    %322 = memref.load %arg8[%c9_55] : memref<32xf32, #tpu.memory_space<smem>>
    %323 = vector.broadcast %322 : f32 to vector<2x14x14xf32>
    %324 = arith.mulf %195, %323 : vector<2x14x14xf32>
    %325 = arith.addf %321, %324 : vector<2x14x14xf32>
    %c17_56 = arith.constant 17 : index
    %326 = memref.load %arg8[%c17_56] : memref<32xf32, #tpu.memory_space<smem>>
    %327 = vector.broadcast %326 : f32 to vector<2x14x14xf32>
    %328 = arith.mulf %244, %327 : vector<2x14x14xf32>
    %329 = arith.addf %325, %328 : vector<2x14x14xf32>
    %c25_57 = arith.constant 25 : index
    %330 = memref.load %arg8[%c25_57] : memref<32xf32, #tpu.memory_space<smem>>
    %331 = vector.broadcast %330 : f32 to vector<2x14x14xf32>
    %332 = arith.mulf %293, %331 : vector<2x14x14xf32>
    %333 = arith.addf %329, %332 : vector<2x14x14xf32>
    %cst_58 = arith.constant 0.000000e+00 : f32
    %cst_59 = arith.constant 6.000000e+00 : f32
    %334 = vector.broadcast %cst_58 : f32 to vector<2x14x14xf32>
    %335 = arith.maximumf %334, %333 : vector<2x14x14xf32>
    %336 = vector.broadcast %cst_59 : f32 to vector<2x14x14xf32>
    %337 = arith.minimumf %336, %335 : vector<2x14x14xf32>
    %c2_60 = arith.constant 2 : index
    %338 = memref.load %arg9[%c2_60] : memref<8xf32, #tpu.memory_space<smem>>
    %339 = vector.broadcast %338 : f32 to vector<2x14x14xf32>
    %c2_61 = arith.constant 2 : index
    %340 = memref.load %arg8[%c2_61] : memref<32xf32, #tpu.memory_space<smem>>
    %341 = vector.broadcast %340 : f32 to vector<2x14x14xf32>
    %342 = arith.mulf %146, %341 : vector<2x14x14xf32>
    %343 = arith.addf %339, %342 : vector<2x14x14xf32>
    %c10_62 = arith.constant 10 : index
    %344 = memref.load %arg8[%c10_62] : memref<32xf32, #tpu.memory_space<smem>>
    %345 = vector.broadcast %344 : f32 to vector<2x14x14xf32>
    %346 = arith.mulf %195, %345 : vector<2x14x14xf32>
    %347 = arith.addf %343, %346 : vector<2x14x14xf32>
    %c18_63 = arith.constant 18 : index
    %348 = memref.load %arg8[%c18_63] : memref<32xf32, #tpu.memory_space<smem>>
    %349 = vector.broadcast %348 : f32 to vector<2x14x14xf32>
    %350 = arith.mulf %244, %349 : vector<2x14x14xf32>
    %351 = arith.addf %347, %350 : vector<2x14x14xf32>
    %c26_64 = arith.constant 26 : index
    %352 = memref.load %arg8[%c26_64] : memref<32xf32, #tpu.memory_space<smem>>
    %353 = vector.broadcast %352 : f32 to vector<2x14x14xf32>
    %354 = arith.mulf %293, %353 : vector<2x14x14xf32>
    %355 = arith.addf %351, %354 : vector<2x14x14xf32>
    %cst_65 = arith.constant 0.000000e+00 : f32
    %cst_66 = arith.constant 6.000000e+00 : f32
    %356 = vector.broadcast %cst_65 : f32 to vector<2x14x14xf32>
    %357 = arith.maximumf %356, %355 : vector<2x14x14xf32>
    %358 = vector.broadcast %cst_66 : f32 to vector<2x14x14xf32>
    %359 = arith.minimumf %358, %357 : vector<2x14x14xf32>
    %c3_67 = arith.constant 3 : index
    %360 = memref.load %arg9[%c3_67] : memref<8xf32, #tpu.memory_space<smem>>
    %361 = vector.broadcast %360 : f32 to vector<2x14x14xf32>
    %c3_68 = arith.constant 3 : index
    %362 = memref.load %arg8[%c3_68] : memref<32xf32, #tpu.memory_space<smem>>
    %363 = vector.broadcast %362 : f32 to vector<2x14x14xf32>
    %364 = arith.mulf %146, %363 : vector<2x14x14xf32>
    %365 = arith.addf %361, %364 : vector<2x14x14xf32>
    %c11_69 = arith.constant 11 : index
    %366 = memref.load %arg8[%c11_69] : memref<32xf32, #tpu.memory_space<smem>>
    %367 = vector.broadcast %366 : f32 to vector<2x14x14xf32>
    %368 = arith.mulf %195, %367 : vector<2x14x14xf32>
    %369 = arith.addf %365, %368 : vector<2x14x14xf32>
    %c19_70 = arith.constant 19 : index
    %370 = memref.load %arg8[%c19_70] : memref<32xf32, #tpu.memory_space<smem>>
    %371 = vector.broadcast %370 : f32 to vector<2x14x14xf32>
    %372 = arith.mulf %244, %371 : vector<2x14x14xf32>
    %373 = arith.addf %369, %372 : vector<2x14x14xf32>
    %c27_71 = arith.constant 27 : index
    %374 = memref.load %arg8[%c27_71] : memref<32xf32, #tpu.memory_space<smem>>
    %375 = vector.broadcast %374 : f32 to vector<2x14x14xf32>
    %376 = arith.mulf %293, %375 : vector<2x14x14xf32>
    %377 = arith.addf %373, %376 : vector<2x14x14xf32>
    %cst_72 = arith.constant 0.000000e+00 : f32
    %cst_73 = arith.constant 6.000000e+00 : f32
    %378 = vector.broadcast %cst_72 : f32 to vector<2x14x14xf32>
    %379 = arith.maximumf %378, %377 : vector<2x14x14xf32>
    %380 = vector.broadcast %cst_73 : f32 to vector<2x14x14xf32>
    %381 = arith.minimumf %380, %379 : vector<2x14x14xf32>
    %c4_74 = arith.constant 4 : index
    %382 = memref.load %arg9[%c4_74] : memref<8xf32, #tpu.memory_space<smem>>
    %383 = vector.broadcast %382 : f32 to vector<2x14x14xf32>
    %c4_75 = arith.constant 4 : index
    %384 = memref.load %arg8[%c4_75] : memref<32xf32, #tpu.memory_space<smem>>
    %385 = vector.broadcast %384 : f32 to vector<2x14x14xf32>
    %386 = arith.mulf %146, %385 : vector<2x14x14xf32>
    %387 = arith.addf %383, %386 : vector<2x14x14xf32>
    %c12_76 = arith.constant 12 : index
    %388 = memref.load %arg8[%c12_76] : memref<32xf32, #tpu.memory_space<smem>>
    %389 = vector.broadcast %388 : f32 to vector<2x14x14xf32>
    %390 = arith.mulf %195, %389 : vector<2x14x14xf32>
    %391 = arith.addf %387, %390 : vector<2x14x14xf32>
    %c20_77 = arith.constant 20 : index
    %392 = memref.load %arg8[%c20_77] : memref<32xf32, #tpu.memory_space<smem>>
    %393 = vector.broadcast %392 : f32 to vector<2x14x14xf32>
    %394 = arith.mulf %244, %393 : vector<2x14x14xf32>
    %395 = arith.addf %391, %394 : vector<2x14x14xf32>
    %c28_78 = arith.constant 28 : index
    %396 = memref.load %arg8[%c28_78] : memref<32xf32, #tpu.memory_space<smem>>
    %397 = vector.broadcast %396 : f32 to vector<2x14x14xf32>
    %398 = arith.mulf %293, %397 : vector<2x14x14xf32>
    %399 = arith.addf %395, %398 : vector<2x14x14xf32>
    %cst_79 = arith.constant 0.000000e+00 : f32
    %cst_80 = arith.constant 6.000000e+00 : f32
    %400 = vector.broadcast %cst_79 : f32 to vector<2x14x14xf32>
    %401 = arith.maximumf %400, %399 : vector<2x14x14xf32>
    %402 = vector.broadcast %cst_80 : f32 to vector<2x14x14xf32>
    %403 = arith.minimumf %402, %401 : vector<2x14x14xf32>
    %c5_81 = arith.constant 5 : index
    %404 = memref.load %arg9[%c5_81] : memref<8xf32, #tpu.memory_space<smem>>
    %405 = vector.broadcast %404 : f32 to vector<2x14x14xf32>
    %c5_82 = arith.constant 5 : index
    %406 = memref.load %arg8[%c5_82] : memref<32xf32, #tpu.memory_space<smem>>
    %407 = vector.broadcast %406 : f32 to vector<2x14x14xf32>
    %408 = arith.mulf %146, %407 : vector<2x14x14xf32>
    %409 = arith.addf %405, %408 : vector<2x14x14xf32>
    %c13_83 = arith.constant 13 : index
    %410 = memref.load %arg8[%c13_83] : memref<32xf32, #tpu.memory_space<smem>>
    %411 = vector.broadcast %410 : f32 to vector<2x14x14xf32>
    %412 = arith.mulf %195, %411 : vector<2x14x14xf32>
    %413 = arith.addf %409, %412 : vector<2x14x14xf32>
    %c21_84 = arith.constant 21 : index
    %414 = memref.load %arg8[%c21_84] : memref<32xf32, #tpu.memory_space<smem>>
    %415 = vector.broadcast %414 : f32 to vector<2x14x14xf32>
    %416 = arith.mulf %244, %415 : vector<2x14x14xf32>
    %417 = arith.addf %413, %416 : vector<2x14x14xf32>
    %c29_85 = arith.constant 29 : index
    %418 = memref.load %arg8[%c29_85] : memref<32xf32, #tpu.memory_space<smem>>
    %419 = vector.broadcast %418 : f32 to vector<2x14x14xf32>
    %420 = arith.mulf %293, %419 : vector<2x14x14xf32>
    %421 = arith.addf %417, %420 : vector<2x14x14xf32>
    %cst_86 = arith.constant 0.000000e+00 : f32
    %cst_87 = arith.constant 6.000000e+00 : f32
    %422 = vector.broadcast %cst_86 : f32 to vector<2x14x14xf32>
    %423 = arith.maximumf %422, %421 : vector<2x14x14xf32>
    %424 = vector.broadcast %cst_87 : f32 to vector<2x14x14xf32>
    %425 = arith.minimumf %424, %423 : vector<2x14x14xf32>
    %c6_88 = arith.constant 6 : index
    %426 = memref.load %arg9[%c6_88] : memref<8xf32, #tpu.memory_space<smem>>
    %427 = vector.broadcast %426 : f32 to vector<2x14x14xf32>
    %c6_89 = arith.constant 6 : index
    %428 = memref.load %arg8[%c6_89] : memref<32xf32, #tpu.memory_space<smem>>
    %429 = vector.broadcast %428 : f32 to vector<2x14x14xf32>
    %430 = arith.mulf %146, %429 : vector<2x14x14xf32>
    %431 = arith.addf %427, %430 : vector<2x14x14xf32>
    %c14_90 = arith.constant 14 : index
    %432 = memref.load %arg8[%c14_90] : memref<32xf32, #tpu.memory_space<smem>>
    %433 = vector.broadcast %432 : f32 to vector<2x14x14xf32>
    %434 = arith.mulf %195, %433 : vector<2x14x14xf32>
    %435 = arith.addf %431, %434 : vector<2x14x14xf32>
    %c22_91 = arith.constant 22 : index
    %436 = memref.load %arg8[%c22_91] : memref<32xf32, #tpu.memory_space<smem>>
    %437 = vector.broadcast %436 : f32 to vector<2x14x14xf32>
    %438 = arith.mulf %244, %437 : vector<2x14x14xf32>
    %439 = arith.addf %435, %438 : vector<2x14x14xf32>
    %c30_92 = arith.constant 30 : index
    %440 = memref.load %arg8[%c30_92] : memref<32xf32, #tpu.memory_space<smem>>
    %441 = vector.broadcast %440 : f32 to vector<2x14x14xf32>
    %442 = arith.mulf %293, %441 : vector<2x14x14xf32>
    %443 = arith.addf %439, %442 : vector<2x14x14xf32>
    %cst_93 = arith.constant 0.000000e+00 : f32
    %cst_94 = arith.constant 6.000000e+00 : f32
    %444 = vector.broadcast %cst_93 : f32 to vector<2x14x14xf32>
    %445 = arith.maximumf %444, %443 : vector<2x14x14xf32>
    %446 = vector.broadcast %cst_94 : f32 to vector<2x14x14xf32>
    %447 = arith.minimumf %446, %445 : vector<2x14x14xf32>
    %c7_95 = arith.constant 7 : index
    %448 = memref.load %arg9[%c7_95] : memref<8xf32, #tpu.memory_space<smem>>
    %449 = vector.broadcast %448 : f32 to vector<2x14x14xf32>
    %c7_96 = arith.constant 7 : index
    %450 = memref.load %arg8[%c7_96] : memref<32xf32, #tpu.memory_space<smem>>
    %451 = vector.broadcast %450 : f32 to vector<2x14x14xf32>
    %452 = arith.mulf %146, %451 : vector<2x14x14xf32>
    %453 = arith.addf %449, %452 : vector<2x14x14xf32>
    %c15_97 = arith.constant 15 : index
    %454 = memref.load %arg8[%c15_97] : memref<32xf32, #tpu.memory_space<smem>>
    %455 = vector.broadcast %454 : f32 to vector<2x14x14xf32>
    %456 = arith.mulf %195, %455 : vector<2x14x14xf32>
    %457 = arith.addf %453, %456 : vector<2x14x14xf32>
    %c23_98 = arith.constant 23 : index
    %458 = memref.load %arg8[%c23_98] : memref<32xf32, #tpu.memory_space<smem>>
    %459 = vector.broadcast %458 : f32 to vector<2x14x14xf32>
    %460 = arith.mulf %244, %459 : vector<2x14x14xf32>
    %461 = arith.addf %457, %460 : vector<2x14x14xf32>
    %c31_99 = arith.constant 31 : index
    %462 = memref.load %arg8[%c31_99] : memref<32xf32, #tpu.memory_space<smem>>
    %463 = vector.broadcast %462 : f32 to vector<2x14x14xf32>
    %464 = arith.mulf %293, %463 : vector<2x14x14xf32>
    %465 = arith.addf %461, %464 : vector<2x14x14xf32>
    %cst_100 = arith.constant 0.000000e+00 : f32
    %cst_101 = arith.constant 6.000000e+00 : f32
    %466 = vector.broadcast %cst_100 : f32 to vector<2x14x14xf32>
    %467 = arith.maximumf %466, %465 : vector<2x14x14xf32>
    %468 = vector.broadcast %cst_101 : f32 to vector<2x14x14xf32>
    %469 = arith.minimumf %468, %467 : vector<2x14x14xf32>
    %470 = vector.shape_cast %315 : vector<2x14x14xf32> to vector<2x1x14x14xf32>
    %471 = vector.shape_cast %337 : vector<2x14x14xf32> to vector<2x1x14x14xf32>
    %472 = vector.shape_cast %359 : vector<2x14x14xf32> to vector<2x1x14x14xf32>
    %473 = vector.shape_cast %381 : vector<2x14x14xf32> to vector<2x1x14x14xf32>
    %474 = vector.shape_cast %403 : vector<2x14x14xf32> to vector<2x1x14x14xf32>
    %475 = vector.shape_cast %425 : vector<2x14x14xf32> to vector<2x1x14x14xf32>
    %476 = vector.shape_cast %447 : vector<2x14x14xf32> to vector<2x1x14x14xf32>
    %477 = vector.shape_cast %469 : vector<2x14x14xf32> to vector<2x1x14x14xf32>
    %478 = tpu.concatenate %470, %471, %472, %473, %474, %475, %476, %477 in 1 : vector<2x1x14x14xf32>, vector<2x1x14x14xf32>, vector<2x1x14x14xf32>, vector<2x1x14x14xf32>, vector<2x1x14x14xf32>, vector<2x1x14x14xf32>, vector<2x1x14x14xf32>, vector<2x1x14x14xf32> -> vector<2x8x14x14xf32>
    %c0_102 = arith.constant 0 : index
    %c0_103 = arith.constant 0 : index
    %c0_104 = arith.constant 0 : index
    %c0_105 = arith.constant 0 : index
    %479 = vector.load %arg10[%c0_102, %c0_103, %c0_104, %c0_105] : memref<2x8x14x14xf32, #tpu.memory_space<vmem>>, vector<2x8x14x14xf32>
    tpu.vector_store %arg10[%c0_102, %c0_103, %c0_104, %c0_105], %478 {strides = array<i32>} : memref<2x8x14x14xf32, #tpu.memory_space<vmem>>, vector<2x8x14x14xf32>,
    return
  }
  func.func @transform_0(%arg0: i32) -> (i32, i32, i32, i32) {
    %c0_i32 = arith.constant 0 : i32
    %c0_i32_0 = arith.constant 0 : i32
    %c0_i32_1 = arith.constant 0 : i32
    %c0_i32_2 = arith.constant 0 : i32
    %c0_i32_3 = arith.constant 0 : i32
    return %c0_i32, %c0_i32_0, %c0_i32_1, %c0_i32_2 : i32, i32, i32, i32
  }
  func.func @transform_1(%arg0: i32) -> i32 {
    %c0_i32 = arith.constant 0 : i32
    %c0_i32_0 = arith.constant 0 : i32
    return %c0_i32 : i32
  }
  func.func @transform_2(%arg0: i32) -> i32 {
    %c0_i32 = arith.constant 0 : i32
    %c0_i32_0 = arith.constant 0 : i32
    return %c0_i32 : i32
  }
  func.func @transform_3(%arg0: i32) -> i32 {
    %c0_i32 = arith.constant 0 : i32
    %c0_i32_0 = arith.constant 0 : i32
    return %c0_i32 : i32
  }
  func.func @transform_4(%arg0: i32) -> i32 {
    %c0_i32 = arith.constant 0 : i32
    %c0_i32_0 = arith.constant 0 : i32
    return %c0_i32 : i32
  }
  func.func @transform_5(%arg0: i32) -> i32 {
    %c0_i32 = arith.constant 0 : i32
    %c0_i32_0 = arith.constant 0 : i32
    return %c0_i32 : i32
  }
  func.func @transform_6(%arg0: i32) -> i32 {
    %c0_i32 = arith.constant 0 : i32
    %c0_i32_0 = arith.constant 0 : i32
    return %c0_i32 : i32
  }
  func.func @transform_7(%arg0: i32) -> i32 {
    %c0_i32 = arith.constant 0 : i32
    %c0_i32_0 = arith.constant 0 : i32
    return %c0_i32 : i32
  }
  func.func @transform_8(%arg0: i32) -> i32 {
    %c0_i32 = arith.constant 0 : i32
    %c0_i32_0 = arith.constant 0 : i32
    return %c0_i32 : i32
  }
  func.func @transform_9(%arg0: i32) -> (i32, i32, i32, i32) {
    %c0_i32 = arith.constant 0 : i32
    %c0_i32_0 = arith.constant 0 : i32
    %c0_i32_1 = arith.constant 0 : i32
    %c0_i32_2 = arith.constant 0 : i32
    %c0_i32_3 = arith.constant 0 : i32
    return %c0_i32, %c0_i32_0, %c0_i32_1, %c0_i32_2 : i32, i32, i32, i32
  }
}

</mosaic_0001>

<llo_original>
// kernel: simple_cnn_forward.1
$region0: #{simple_cnn_forward.1}
  #allocation0 [shape = 'u32[]', space=smem, size = 0x4, offset = 0x4, fixed_abs, tag = 'smem constant byte address 0x4 - core index']
  #allocation1 [shape = 'u32[144,128]{1,0:T(1,128)}', space=vmem, size = 0x12000, scoped, tag = 'internal scratch']
  #allocation2 [shape = 'f32[2,4,16,16]{3,2,1,0:T(8,128)}', space=vmem, size = 0x10000, scoped, tag = 'scratch operand']
  #allocation3 [shape = 'f32[1]{0:T(128)S(6)}', space=smem, size = 0x200, scoped, tag = 'scoped memory for simple_cnn_forward.1']
  %s0 = inlined_call_operand.hbm [shape: f32[2,1,16,16], index: 0, kind: input, shape index: {}]
  %s1 = inlined_call_operand.vmem [shape: f32[9], index: 1, kind: input, shape index: {}]
  %s2 = inlined_call_operand.<no memory space> [shape: f32[1], index: 2, kind: input, shape index: {}]
  %s3 = inlined_call_operand.vmem [shape: f32[4], index: 3, kind: input, shape index: {}]
  %s4 = inlined_call_operand.vmem [shape: f32[4], index: 4, kind: input, shape index: {}]
  %s5 = inlined_call_operand.vmem [shape: f32[36], index: 5, kind: input, shape index: {}]
  %s6 = inlined_call_operand.hbm [shape: f32[4], index: 6, kind: input, shape index: {}]
  %s7 = inlined_call_operand.vmem [shape: f32[32], index: 7, kind: input, shape index: {}]
  %s8 = inlined_call_operand.vmem [shape: f32[8], index: 8, kind: input, shape index: {}]
  %s9 = inlined_call_operand.vmem [shape: f32[2,8,14,14], index: 9, kind: output, shape index: {}]
  %s10 = sld [smem:[#allocation0]]
  $region78: #{simple_cnn_forward.1} parent=0
    _
  %s12 = ssub.s32 1, %s10
  %s13 = scalar_select 0, %s12, %s10
  %14 = sst [smem:[#allocation3]] %s2
  $region1: #{simple_cnn_forward.1} parent=0
    #allocation4 [shape = 'u8[16384]{0}', space=vmem, size = 0x4000, scoped, tag = 'input window, operand 0, single buffered']
    #allocation5 [shape = 's32[1]{0}', space=sflag, size = 0x4, scoped, tag = 'scoped memory for simple_cnn_forward.1']
    #allocation6 [shape = 's32[1]{0}', space=sflag, size = 0x4, scoped, tag = 'scoped memory for simple_cnn_forward.1']
    #allocation7 [shape = 's32[1]{0}', space=sflag, size = 0x4, scoped, tag = 'scoped memory for simple_cnn_forward.1']
    #allocation8 [shape = 'u8[512]{0}', space=smem, size = 0x200, scoped, tag = 'input window, operand 1, single buffered']
    #allocation9 [shape = 'u8[512]{0}', space=smem, size = 0x200, scoped, tag = 'input window, operand 3, single buffered']
    #allocation10 [shape = 's32[1]{0}', space=sflag, size = 0x4, scoped, tag = 'scoped memory for simple_cnn_forward.1']
    #allocation11 [shape = 'u8[512]{0}', space=smem, size = 0x200, scoped, tag = 'input window, operand 4, single buffered']
    #allocation12 [shape = 'u8[512]{0}', space=smem, size = 0x200, scoped, tag = 'input window, operand 5, single buffered']
    #allocation13 [shape = 's32[1]{0}', space=sflag, size = 0x4, scoped, tag = 'scoped memory for simple_cnn_forward.1']
    #allocation14 [shape = 'u8[512]{0}', space=smem, size = 0x200, scoped, tag = 'input window, operand 6, single buffered']
    #allocation15 [shape = 'u8[512]{0}', space=smem, size = 0x200, scoped, tag = 'input window, operand 7, single buffered']
    #allocation16 [shape = 'u8[512]{0}', space=smem, size = 0x200, scoped, tag = 'input window, operand 8, single buffered']
    #allocation17 [shape = 's32[1]{0}', space=sflag, size = 0x4, scoped, tag = 'scoped memory for simple_cnn_forward.1']
    %15 = vsyncpa [#allocation5], 0
    %16 = vsyncpa [#allocation7], 0
    %17 = vsyncpa [#allocation10], 0
    %18 = vsyncpa [#allocation13], 0
    %19 = vsyncpa [#allocation6], 0
    %20 = vsyncpa [#allocation17], 0
    // Predicated region
    $region2: #{simple_cnn_forward.1} parent=1 // pred_check
      _
    $region3: #{simple_cnn_forward.1} parent=1 // pred_check_branch
      %22 = sbr.rel (0) target = $region5
    $region4: #{simple_cnn_forward.1} parent=1 // pred_region
      %s24 = ssub.s32 512, 512
      %25 = vsyncadd [#allocation5], %s24
      %s26 = sshll.u32 [#allocation4], 4
      %s27 = int_to_ptr.vmem [resolvable:$true] %s26
      %32 = dma.hbm_to_vmem [thread:$0]  %s0, 512, %s27, [#allocation5], 128, 128, 8
    $region5: #{simple_cnn_forward.1} parent=1 // pred_fallthru
      _
    // Predicated region
    $region6: #{simple_cnn_forward.1} parent=1 // pred_check
      _
    $region7: #{simple_cnn_forward.1} parent=1 // pred_check_branch
      %34 = sbr.rel (0) target = $region9
    $region8: #{simple_cnn_forward.1} parent=1 // pred_region
      %s36 = ssub.s32 16, 16
      %37 = vsyncadd [#allocation7], %s36
      %s39 = sshll.u32 %s1, 4
      %s40 = int_to_ptr.vmem [resolvable:$true] %s39
      %42 = dma.vmem_to_smem %s40, 16, [#allocation8], [#allocation7]
    $region9: #{simple_cnn_forward.1} parent=1 // pred_fallthru
      _
    // Predicated region
    $region10: #{simple_cnn_forward.1} parent=1 // pred_check
      _
    $region11: #{simple_cnn_forward.1} parent=1 // pred_check_branch
      %44 = sbr.rel (0) target = $region13
    $region12: #{simple_cnn_forward.1} parent=1 // pred_region
      _
    $region13: #{simple_cnn_forward.1} parent=1 // pred_fallthru
      _
    // Predicated region
    $region14: #{simple_cnn_forward.1} parent=1 // pred_check
      _
    $region15: #{simple_cnn_forward.1} parent=1 // pred_check_branch
      %46 = sbr.rel (0) target = $region17
    $region16: #{simple_cnn_forward.1} parent=1 // pred_region
      %s48 = ssub.s32 16, 16
      %49 = vsyncadd [#allocation10], %s48
      %s51 = sshll.u32 %s3, 4
      %s52 = int_to_ptr.vmem [resolvable:$true] %s51
      %54 = dma.vmem_to_smem %s52, 16, [#allocation9], [#allocation10]
    $region17: #{simple_cnn_forward.1} parent=1 // pred_fallthru
      _
    // Predicated region
    $region18: #{simple_cnn_forward.1} parent=1 // pred_check
      _
    $region19: #{simple_cnn_forward.1} parent=1 // pred_check_branch
      %56 = sbr.rel (0) target = $region21
    $region20: #{simple_cnn_forward.1} parent=1 // pred_region
      %s58 = ssub.s32 16, 16
      %59 = vsyncadd [#allocation10], %s58
      %s61 = sshll.u32 %s4, 4
      %s62 = int_to_ptr.vmem [resolvable:$true] %s61
      %64 = dma.vmem_to_smem %s62, 16, [#allocation11], [#allocation10]
    $region21: #{simple_cnn_forward.1} parent=1 // pred_fallthru
      _
    // Predicated region
    $region22: #{simple_cnn_forward.1} parent=1 // pred_check
      _
    $region23: #{simple_cnn_forward.1} parent=1 // pred_check_branch
      %66 = sbr.rel (0) target = $region25
    $region24: #{simple_cnn_forward.1} parent=1 // pred_region
      %s68 = ssub.s32 16, 16
      %69 = vsyncadd [#allocation13], %s68
      %s71 = sshll.u32 %s5, 4
      %s72 = int_to_ptr.vmem [resolvable:$true] %s71
      %74 = dma.vmem_to_smem %s72, 16, [#allocation12], [#allocation13]
    $region25: #{simple_cnn_forward.1} parent=1 // pred_fallthru
      _
    // Predicated region
    $region26: #{simple_cnn_forward.1} parent=1 // pred_check
      _
    $region27: #{simple_cnn_forward.1} parent=1 // pred_check_branch
      %76 = sbr.rel (0) target = $region29
    $region28: #{simple_cnn_forward.1} parent=1 // pred_region
      %s78 = ssub.s32 16, 16
      %79 = vsyncadd [#allocation6], %s78
      %82 = dma.hbm_to_smem %s6, 16, [#allocation14], [#allocation6]
    $region29: #{simple_cnn_forward.1} parent=1 // pred_fallthru
      _
    // Predicated region
    $region30: #{simple_cnn_forward.1} parent=1 // pred_check
      _
    $region31: #{simple_cnn_forward.1} parent=1 // pred_check_branch
      %84 = sbr.rel (0) target = $region33
    $region32: #{simple_cnn_forward.1} parent=1 // pred_region
      %s86 = ssub.s32 16, 16
      %87 = vsyncadd [#allocation13], %s86
      %s89 = sshll.u32 %s7, 4
      %s90 = int_to_ptr.vmem [resolvable:$true] %s89
      %92 = dma.vmem_to_smem %s90, 16, [#allocation15], [#allocation13]
    $region33: #{simple_cnn_forward.1} parent=1 // pred_fallthru
      _
    // Predicated region
    $region34: #{simple_cnn_forward.1} parent=1 // pred_check
      _
    $region35: #{simple_cnn_forward.1} parent=1 // pred_check_branch
      %94 = sbr.rel (0) target = $region37
    $region36: #{simple_cnn_forward.1} parent=1 // pred_region
      %s96 = ssub.s32 16, 16
      %97 = vsyncadd [#allocation17], %s96
      %s99 = sshll.u32 %s8, 4
      %s100 = int_to_ptr.vmem [resolvable:$true] %s99
      %102 = dma.vmem_to_smem %s100, 16, [#allocation16], [#allocation17]
    $region37: #{simple_cnn_forward.1} parent=1 // pred_fallthru
      _
    // Predicated region
    $region38: #{simple_cnn_forward.1} parent=1 // pred_check
      _
    $region39: #{simple_cnn_forward.1} parent=1 // pred_check_branch
      %104 = sbr.rel (0) target = $region41
    $region40: #{simple_cnn_forward.1} parent=1 // pred_region
      %105 = dma.done [#allocation5], 512
    $region41: #{simple_cnn_forward.1} parent=1 // pred_fallthru
      _
    // Predicated region
    $region42: #{simple_cnn_forward.1} parent=1 // pred_check
      _
    $region43: #{simple_cnn_forward.1} parent=1 // pred_check_branch
      %107 = sbr.rel (0) target = $region45
    $region44: #{simple_cnn_forward.1} parent=1 // pred_region
      %108 = dma.done [#allocation7], 16
    $region45: #{simple_cnn_forward.1} parent=1 // pred_fallthru
      _
    // Predicated region
    $region46: #{simple_cnn_forward.1} parent=1 // pred_check
      _
    $region47: #{simple_cnn_forward.1} parent=1 // pred_check_branch
      %110 = sbr.rel (0) target = $region49
    $region48: #{simple_cnn_forward.1} parent=1 // pred_region
      %111 = dma.done [#allocation10], 16
    $region49: #{simple_cnn_forward.1} parent=1 // pred_fallthru
      _
    // Predicated region
    $region50: #{simple_cnn_forward.1} parent=1 // pred_check
      _
    $region51: #{simple_cnn_forward.1} parent=1 // pred_check_branch
      %113 = sbr.rel (0) target = $region53
    $region52: #{simple_cnn_forward.1} parent=1 // pred_region
      %114 = dma.done [#allocation10], 16
    $region53: #{simple_cnn_forward.1} parent=1 // pred_fallthru
      _
    // Predicated region
    $region54: #{simple_cnn_forward.1} parent=1 // pred_check
      _
    $region55: #{simple_cnn_forward.1} parent=1 // pred_check_branch
      %116 = sbr.rel (0) target = $region57
    $region56: #{simple_cnn_forward.1} parent=1 // pred_region
      %117 = dma.done [#allocation13], 16
    $region57: #{simple_cnn_forward.1} parent=1 // pred_fallthru
      _
    // Predicated region
    $region58: #{simple_cnn_forward.1} parent=1 // pred_check
      _
    $region59: #{simple_cnn_forward.1} parent=1 // pred_check_branch
      %119 = sbr.rel (0) target = $region61
    $region60: #{simple_cnn_forward.1} parent=1 // pred_region
      %120 = dma.done [#allocation6], 16
    $region61: #{simple_cnn_forward.1} parent=1 // pred_fallthru
      _
    // Predicated region
    $region62: #{simple_cnn_forward.1} parent=1 // pred_check
      _
    $region63: #{simple_cnn_forward.1} parent=1 // pred_check_branch
      %122 = sbr.rel (0) target = $region65
    $region64: #{simple_cnn_forward.1} parent=1 // pred_region
      %123 = dma.done [#allocation13], 16
    $region65: #{simple_cnn_forward.1} parent=1 // pred_fallthru
      _
    // Predicated region
    $region66: #{simple_cnn_forward.1} parent=1 // pred_check
      _
    $region67: #{simple_cnn_forward.1} parent=1 // pred_check_branch
      %125 = sbr.rel (0) target = $region69
    $region68: #{simple_cnn_forward.1} parent=1 // pred_region
      %126 = dma.done [#allocation17], 16
    $region69: #{simple_cnn_forward.1} parent=1 // pred_fallthru
      _
    %127 = sfence
    %v128 = vld [vmem:[#allocation4] sm:$0xff]
    %v129 = vld [vmem:[#allocation4 + $0x8] sm:$0xff]
    %v130 = vld [vmem:[#allocation4 + $0x10] sm:$0xff]
    %v131 = vld [vmem:[#allocation4 + $0x18] sm:$0xff]
    %s132 = sld [smem:[#allocation3]]
    %v133 = vstv %s132
    %s134 = sld [smem:[#allocation8]]
    %v135 = vstv %s134
    %v136 = vmul.f32 %v128, %v135
    %v137 = vmul.f32 %v129, %v135
    %v138 = vmul.f32 %v130, %v135
    %v139 = vmul.f32 %v131, %v135
    %v140 = vadd.f32 %v133, %v136
    %v141 = vadd.f32 %v133, %v137
    %v142 = vadd.f32 %v133, %v138
    %v143 = vadd.f32 %v133, %v139
    %s144 = sld [smem:[#allocation8 + $0x1]]
    %v145 = vstv %s144
    %v146 = vmul.f32 %v128, %v145
    %v147 = vmul.f32 %v129, %v145
    %v148 = vmul.f32 %v130, %v145
    %v149 = vmul.f32 %v131, %v145
    %154 = vrot.lane.b32.xlu0 %v146, 127
    %v155 = vpop.permute.xlu0 %154
    %156 = vrot.lane.b32.xlu0 %v147, 127
    %v157 = vpop.permute.xlu0 %156
    %158 = vrot.lane.b32.xlu0 %v148, 127
    %v159 = vpop.permute.xlu0 %158
    %160 = vrot.lane.b32.xlu0 %v149, 127
    %v161 = vpop.permute.xlu0 %160
    %v166 = vadd.f32 %v140, %v155
    %v167 = vadd.f32 %v141, %v157
    %v168 = vadd.f32 %v142, %v159
    %v169 = vadd.f32 %v143, %v161
    %s170 = sld [smem:[#allocation8 + $0x2]]
    %v171 = vstv %s170
    %v172 = vmul.f32 %v128, %v171
    %v173 = vmul.f32 %v129, %v171
    %v174 = vmul.f32 %v130, %v171
    %v175 = vmul.f32 %v131, %v171
    %180 = vrot.lane.b32.xlu0 %v172, 126
    %v181 = vpop.permute.xlu0 %180
    %182 = vrot.lane.b32.xlu0 %v173, 126
    %v183 = vpop.permute.xlu0 %182
    %184 = vrot.lane.b32.xlu0 %v174, 126
    %v185 = vpop.permute.xlu0 %184
    %186 = vrot.lane.b32.xlu0 %v175, 126
    %v187 = vpop.permute.xlu0 %186
    %v192 = vadd.f32 %v166, %v181
    %v193 = vadd.f32 %v167, %v183
    %v194 = vadd.f32 %v168, %v185
    %v195 = vadd.f32 %v169, %v187
    %s196 = sld [smem:[#allocation8 + $0x3]]
    %v197 = vstv %s196
    %v198 = vmul.f32 %v128, %v197
    %v199 = vmul.f32 %v129, %v197
    %v200 = vmul.f32 %v130, %v197
    %v201 = vmul.f32 %v131, %v197
    %vm206 = vcmask 1046528
    %v207 = vrot.slane %v198, 1
    %v208 = vrot.slane %v199, 1
    %v209 = vsel %vm206, %v207, %v208
    %v210 = vrot.slane %v200, 1
    %v211 = vrot.slane %v201, 1
    %v212 = vsel %vm206, %v210, %v211
    %v217 = vadd.f32 %v192, %v209
    %v218 = vadd.f32 %v193, %v208
    %v219 = vadd.f32 %v194, %v212
    %v220 = vadd.f32 %v195, %v211
    %s221 = sld [smem:[#allocation8 + $0x4]]
    %v222 = vstv %s221
    %v223 = vmul.f32 %v128, %v222
    %v224 = vmul.f32 %v129, %v222
    %v225 = vmul.f32 %v130, %v222
    %v226 = vmul.f32 %v131, %v222
    %v231 = vrot.slane %v223, 1
    %v232 = vrot.slane %v224, 1
    %v233 = vsel %vm206, %v231, %v232
    %v234 = vrot.slane %v225, 1
    %v235 = vrot.slane %v226, 1
    %v236 = vsel %vm206, %v234, %v235
    %237 = vrot.lane.b32.xlu0 %v233, 127
    %v238 = vpop.permute.xlu0 %237
    %239 = vrot.lane.b32.xlu0 %v232, 127
    %v240 = vpop.permute.xlu0 %239
    %241 = vrot.lane.b32.xlu0 %v236, 127
    %v242 = vpop.permute.xlu0 %241
    %243 = vrot.lane.b32.xlu0 %v235, 127
    %v244 = vpop.permute.xlu0 %243
    %v249 = vadd.f32 %v217, %v238
    %v250 = vadd.f32 %v218, %v240
    %v251 = vadd.f32 %v219, %v242
    %v252 = vadd.f32 %v220, %v244
    %s253 = sld [smem:[#allocation8 + $0x5]]
    %v254 = vstv %s253
    %v255 = vmul.f32 %v128, %v254
    %v256 = vmul.f32 %v129, %v254
    %v257 = vmul.f32 %v130, %v254
    %v258 = vmul.f32 %v131, %v254
    %v263 = vrot.slane %v255, 1
    %v264 = vrot.slane %v256, 1
    %v265 = vsel %vm206, %v263, %v264
    %v266 = vrot.slane %v257, 1
    %v267 = vrot.slane %v258, 1
    %v268 = vsel %vm206, %v266, %v267
    %269 = vrot.lane.b32.xlu0 %v265, 126
    %v270 = vpop.permute.xlu0 %269
    %271 = vrot.lane.b32.xlu0 %v264, 126
    %v272 = vpop.permute.xlu0 %271
    %273 = vrot.lane.b32.xlu0 %v268, 126
    %v274 = vpop.permute.xlu0 %273
    %275 = vrot.lane.b32.xlu0 %v267, 126
    %v276 = vpop.permute.xlu0 %275
    %v281 = vadd.f32 %v249, %v270
    %v282 = vadd.f32 %v250, %v272
    %v283 = vadd.f32 %v251, %v274
    %v284 = vadd.f32 %v252, %v276
    %s285 = sld [smem:[#allocation8 + $0x6]]
    %v286 = vstv %s285
    %v287 = vmul.f32 %v128, %v286
    %v288 = vmul.f32 %v129, %v286
    %v289 = vmul.f32 %v130, %v286
    %v290 = vmul.f32 %v131, %v286
    %vm295 = vcmask 1045504
    %v296 = vrot.slane %v287, 2
    %v297 = vrot.slane %v288, 2
    %v298 = vsel %vm295, %v296, %v297
    %v299 = vrot.slane %v289, 2
    %v300 = vrot.slane %v290, 2
    %v301 = vsel %vm295, %v299, %v300
    %v306 = vadd.f32 %v281, %v298
    %v307 = vadd.f32 %v282, %v297
    %v308 = vadd.f32 %v283, %v301
    %v309 = vadd.f32 %v284, %v300
    %s310 = sld [smem:[#allocation8 + $0x7]]
    %v311 = vstv %s310
    %v312 = vmul.f32 %v128, %v311
    %v313 = vmul.f32 %v129, %v311
    %v314 = vmul.f32 %v130, %v311
    %v315 = vmul.f32 %v131, %v311
    %v320 = vrot.slane %v312, 2
    %v321 = vrot.slane %v313, 2
    %v322 = vsel %vm295, %v320, %v321
    %v323 = vrot.slane %v314, 2
    %v324 = vrot.slane %v315, 2
    %v325 = vsel %vm295, %v323, %v324
    %326 = vrot.lane.b32.xlu0 %v322, 127
    %v327 = vpop.permute.xlu0 %326
    %328 = vrot.lane.b32.xlu0 %v321, 127
    %v329 = vpop.permute.xlu0 %328
    %330 = vrot.lane.b32.xlu0 %v325, 127
    %v331 = vpop.permute.xlu0 %330
    %332 = vrot.lane.b32.xlu0 %v324, 127
    %v333 = vpop.permute.xlu0 %332
    %v338 = vadd.f32 %v306, %v327
    %v339 = vadd.f32 %v307, %v329
    %v340 = vadd.f32 %v308, %v331
    %v341 = vadd.f32 %v309, %v333
    %s342 = sld [smem:[#allocation8 + $0x8]]
    %v343 = vstv %s342
    %v344 = vmul.f32 %v128, %v343
    %v345 = vmul.f32 %v129, %v343
    %v346 = vmul.f32 %v130, %v343
    %v347 = vmul.f32 %v131, %v343
    %v352 = vrot.slane %v344, 2
    %v353 = vrot.slane %v345, 2
    %v354 = vsel %vm295, %v352, %v353
    %v355 = vrot.slane %v346, 2
    %v356 = vrot.slane %v347, 2
    %v357 = vsel %vm295, %v355, %v356
    %358 = vrot.lane.b32.xlu0 %v354, 126
    %v359 = vpop.permute.xlu0 %358
    %360 = vrot.lane.b32.xlu0 %v353, 126
    %v361 = vpop.permute.xlu0 %360
    %362 = vrot.lane.b32.xlu0 %v357, 126
    %v363 = vpop.permute.xlu0 %362
    %364 = vrot.lane.b32.xlu0 %v356, 126
    %v365 = vpop.permute.xlu0 %364
    %v370 = vadd.f32 %v338, %v359
    %v371 = vadd.f32 %v339, %v361
    %v372 = vadd.f32 %v340, %v363
    %v373 = vadd.f32 %v341, %v365
    %s374 = sld [smem:[#allocation9]]
    %v375 = vstv %s374
    %v376 = vmul.f32 %v370, %v375
    %v377 = vmul.f32 %v371, %v375
    %v378 = vmul.f32 %v372, %v375
    %v379 = vmul.f32 %v373, %v375
    %s380 = sld [smem:[#allocation11]]
    %v381 = vstv %s380
    %v382 = vadd.f32 %v376, %v381
    %v383 = vadd.f32 %v377, %v381
    %v384 = vadd.f32 %v378, %v381
    %v385 = vadd.f32 %v379, %v381
    %v386 = vmax.f32 %v382, 0.0
    %v387 = vmax.f32 %v383, 0.0
    %v388 = vmax.f32 %v384, 0.0
    %v389 = vmax.f32 %v385, 0.0
    %v390 = vmin.f32 %v386, 6.0
    %v391 = vmin.f32 %v387, 6.0
    %v392 = vmin.f32 %v388, 6.0
    %v393 = vmin.f32 %v389, 6.0
    %s394 = sld [smem:[#allocation9 + $0x1]]
    %v395 = vstv %s394
    %v396 = vmul.f32 %v370, %v395
    %v397 = vmul.f32 %v371, %v395
    %v398 = vmul.f32 %v372, %v395
    %v399 = vmul.f32 %v373, %v395
    %s400 = sld [smem:[#allocation11 + $0x1]]
    %v401 = vstv %s400
    %v402 = vadd.f32 %v396, %v401
    %v403 = vadd.f32 %v397, %v401
    %v404 = vadd.f32 %v398, %v401
    %v405 = vadd.f32 %v399, %v401
    %v406 = vmax.f32 %v402, 0.0
    %v407 = vmax.f32 %v403, 0.0
    %v408 = vmax.f32 %v404, 0.0
    %v409 = vmax.f32 %v405, 0.0
    %v410 = vmin.f32 %v406, 6.0
    %v411 = vmin.f32 %v407, 6.0
    %v412 = vmin.f32 %v408, 6.0
    %v413 = vmin.f32 %v409, 6.0
    %s414 = sld [smem:[#allocation9 + $0x2]]
    %v415 = vstv %s414
    %v416 = vmul.f32 %v370, %v415
    %v417 = vmul.f32 %v371, %v415
    %v418 = vmul.f32 %v372, %v415
    %v419 = vmul.f32 %v373, %v415
    %s420 = sld [smem:[#allocation11 + $0x2]]
    %v421 = vstv %s420
    %v422 = vadd.f32 %v416, %v421
    %v423 = vadd.f32 %v417, %v421
    %v424 = vadd.f32 %v418, %v421
    %v425 = vadd.f32 %v419, %v421
    %v426 = vmax.f32 %v422, 0.0
    %v427 = vmax.f32 %v423, 0.0
    %v428 = vmax.f32 %v424, 0.0
    %v429 = vmax.f32 %v425, 0.0
    %v430 = vmin.f32 %v426, 6.0
    %v431 = vmin.f32 %v427, 6.0
    %v432 = vmin.f32 %v428, 6.0
    %v433 = vmin.f32 %v429, 6.0
    %s434 = sld [smem:[#allocation9 + $0x3]]
    %v435 = vstv %s434
    %v436 = vmul.f32 %v370, %v435
    %v437 = vmul.f32 %v371, %v435
    %v438 = vmul.f32 %v372, %v435
    %v439 = vmul.f32 %v373, %v435
    %s440 = sld [smem:[#allocation11 + $0x3]]
    %v441 = vstv %s440
    %v442 = vadd.f32 %v436, %v441
    %v443 = vadd.f32 %v437, %v441
    %v444 = vadd.f32 %v438, %v441
    %v445 = vadd.f32 %v439, %v441
    %v446 = vmax.f32 %v442, 0.0
    %v447 = vmax.f32 %v443, 0.0
    %v448 = vmax.f32 %v444, 0.0
    %v449 = vmax.f32 %v445, 0.0
    %v450 = vmin.f32 %v446, 6.0
    %v451 = vmin.f32 %v447, 6.0
    %v452 = vmin.f32 %v448, 6.0
    %v453 = vmin.f32 %v449, 6.0
    %vm454 = vcmask 130048
    %455 = vst.msk [vmem:[#allocation2] sm:$0xff] %vm454, 0.0
    %456 = vst.msk [vmem:[#allocation2 + $0x8] sm:$0xff] %vm454, 0.0
    %457 = vst.msk [vmem:[#allocation2 + $0x10] sm:$0xff] %vm454, 0.0
    %458 = vst.msk [vmem:[#allocation2 + $0x18] sm:$0xff] %vm454, 0.0
    %459 = vst.msk [vmem:[#allocation2 + $0x20] sm:$0xff] %vm454, 0.0
    %460 = vst.msk [vmem:[#allocation2 + $0x28] sm:$0xff] %vm454, 0.0
    %461 = vst.msk [vmem:[#allocation2 + $0x30] sm:$0xff] %vm454, 0.0
    %462 = vst.msk [vmem:[#allocation2 + $0x38] sm:$0xff] %vm454, 0.0
    %463 = vst.msk [vmem:[#allocation2 + $0x40] sm:$0xff] %vm454, 0.0
    %464 = vst.msk [vmem:[#allocation2 + $0x48] sm:$0xff] %vm454, 0.0
    %465 = vst.msk [vmem:[#allocation2 + $0x50] sm:$0xff] %vm454, 0.0
    %466 = vst.msk [vmem:[#allocation2 + $0x58] sm:$0xff] %vm454, 0.0
    %467 = vst.msk [vmem:[#allocation2 + $0x60] sm:$0xff] %vm454, 0.0
    %468 = vst.msk [vmem:[#allocation2 + $0x68] sm:$0xff] %vm454, 0.0
    %469 = vst.msk [vmem:[#allocation2 + $0x70] sm:$0xff] %vm454, 0.0
    %470 = vst.msk [vmem:[#allocation2 + $0x78] sm:$0xff] %vm454, 0.0
    %487 = vrot.lane.b32.xlu0 %v390, 1
    %v488 = vpop.permute.xlu0 %487
    %489 = vrot.lane.b32.xlu0 %v391, 1
    %v490 = vpop.permute.xlu0 %489
    %491 = vrot.lane.b32.xlu0 %v410, 1
    %v492 = vpop.permute.xlu0 %491
    %493 = vrot.lane.b32.xlu0 %v411, 1
    %v494 = vpop.permute.xlu0 %493
    %495 = vrot.lane.b32.xlu0 %v430, 1
    %v496 = vpop.permute.xlu0 %495
    %497 = vrot.lane.b32.xlu0 %v431, 1
    %v498 = vpop.permute.xlu0 %497
    %499 = vrot.lane.b32.xlu0 %v450, 1
    %v500 = vpop.permute.xlu0 %499
    %501 = vrot.lane.b32.xlu0 %v451, 1
    %v502 = vpop.permute.xlu0 %501
    %503 = vrot.lane.b32.xlu0 %v392, 1
    %v504 = vpop.permute.xlu0 %503
    %505 = vrot.lane.b32.xlu0 %v393, 1
    %v506 = vpop.permute.xlu0 %505
    %507 = vrot.lane.b32.xlu0 %v412, 1
    %v508 = vpop.permute.xlu0 %507
    %509 = vrot.lane.b32.xlu0 %v413, 1
    %v510 = vpop.permute.xlu0 %509
    %511 = vrot.lane.b32.xlu0 %v432, 1
    %v512 = vpop.permute.xlu0 %511
    %513 = vrot.lane.b32.xlu0 %v433, 1
    %v514 = vpop.permute.xlu0 %513
    %515 = vrot.lane.b32.xlu0 %v452, 1
    %v516 = vpop.permute.xlu0 %515
    %517 = vrot.lane.b32.xlu0 %v453, 1
    %v518 = vpop.permute.xlu0 %517
    %vm535 = vcmask 121864
    %536 = vst.msk [vmem:[#allocation2 + $0x1] sm:$0xff] %vm535, %v488
    %vm537 = vcmask 119816
    %538 = vst.msk [vmem:[#allocation2 + $0x9] sm:$0x3f] %vm537, %v490
    %539 = vst.msk [vmem:[#allocation2 + $0x11] sm:$0xff] %vm535, %v492
    %540 = vst.msk [vmem:[#allocation2 + $0x19] sm:$0x3f] %vm537, %v494
    %541 = vst.msk [vmem:[#allocation2 + $0x21] sm:$0xff] %vm535, %v496
    %542 = vst.msk [vmem:[#allocation2 + $0x29] sm:$0x3f] %vm537, %v498
    %543 = vst.msk [vmem:[#allocation2 + $0x31] sm:$0xff] %vm535, %v500
    %544 = vst.msk [vmem:[#allocation2 + $0x39] sm:$0x3f] %vm537, %v502
    %545 = vst.msk [vmem:[#allocation2 + $0x41] sm:$0xff] %vm535, %v504
    %546 = vst.msk [vmem:[#allocation2 + $0x49] sm:$0x3f] %vm537, %v506
    %547 = vst.msk [vmem:[#allocation2 + $0x51] sm:$0xff] %vm535, %v508
    %548 = vst.msk [vmem:[#allocation2 + $0x59] sm:$0x3f] %vm537, %v510
    %549 = vst.msk [vmem:[#allocation2 + $0x61] sm:$0xff] %vm535, %v512
    %550 = vst.msk [vmem:[#allocation2 + $0x69] sm:$0x3f] %vm537, %v514
    %551 = vst.msk [vmem:[#allocation2 + $0x71] sm:$0xff] %vm535, %v516
    %552 = vst.msk [vmem:[#allocation2 + $0x79] sm:$0x3f] %vm537, %v518
    %v553 = vld [vmem:[#allocation2] sm:$0xff]
    %v554 = vld [vmem:[#allocation2 + $0x8] sm:$0xff]
    %v555 = vld [vmem:[#allocation2 + $0x10] sm:$0xff]
    %v556 = vld [vmem:[#allocation2 + $0x18] sm:$0xff]
    %v557 = vld [vmem:[#allocation2 + $0x20] sm:$0xff]
    %v558 = vld [vmem:[#allocation2 + $0x28] sm:$0xff]
    %v559 = vld [vmem:[#allocation2 + $0x30] sm:$0xff]
    %v560 = vld [vmem:[#allocation2 + $0x38] sm:$0xff]
    %v561 = vld [vmem:[#allocation2 + $0x40] sm:$0xff]
    %v562 = vld [vmem:[#allocation2 + $0x48] sm:$0xff]
    %v563 = vld [vmem:[#allocation2 + $0x50] sm:$0xff]
    %v564 = vld [vmem:[#allocation2 + $0x58] sm:$0xff]
    %v565 = vld [vmem:[#allocation2 + $0x60] sm:$0xff]
    %v566 = vld [vmem:[#allocation2 + $0x68] sm:$0xff]
    %v567 = vld [vmem:[#allocation2 + $0x70] sm:$0xff]
    %v568 = vld [vmem:[#allocation2 + $0x78] sm:$0xff]
    %s569 = sld [smem:[#allocation14]]
    %v570 = vstv %s569
    %s571 = sld [smem:[#allocation12]]
    %v572 = vstv %s571
    %v573 = vmul.f32 %v553, %v572
    %v574 = vmul.f32 %v554, %v572
    %v575 = vmul.f32 %v561, %v572
    %v576 = vmul.f32 %v562, %v572
    %v577 = vadd.f32 %v570, %v573
    %v578 = vadd.f32 %v570, %v574
    %v579 = vadd.f32 %v570, %v575
    %v580 = vadd.f32 %v570, %v576
    %s581 = sld [smem:[#allocation12 + $0x1]]
    %v582 = vstv %s581
    %v583 = vmul.f32 %v553, %v582
    %v584 = vmul.f32 %v554, %v582
    %v585 = vmul.f32 %v561, %v582
    %v586 = vmul.f32 %v562, %v582
    %591 = vrot.lane.b32.xlu0 %v583, 127
    %v592 = vpop.permute.xlu0 %591
    %593 = vrot.lane.b32.xlu0 %v584, 127
    %v594 = vpop.permute.xlu0 %593
    %595 = vrot.lane.b32.xlu0 %v585, 127
    %v596 = vpop.permute.xlu0 %595
    %597 = vrot.lane.b32.xlu0 %v586, 127
    %v598 = vpop.permute.xlu0 %597
    %v603 = vadd.f32 %v577, %v592
    %v604 = vadd.f32 %v578, %v594
    %v605 = vadd.f32 %v579, %v596
    %v606 = vadd.f32 %v580, %v598
    %s607 = sld [smem:[#allocation12 + $0x2]]
    %v608 = vstv %s607
    %v609 = vmul.f32 %v553, %v608
    %v610 = vmul.f32 %v554, %v608
    %v611 = vmul.f32 %v561, %v608
    %v612 = vmul.f32 %v562, %v608
    %617 = vrot.lane.b32.xlu0 %v609, 126
    %v618 = vpop.permute.xlu0 %617
    %619 = vrot.lane.b32.xlu0 %v610, 126
    %v620 = vpop.permute.xlu0 %619
    %621 = vrot.lane.b32.xlu0 %v611, 126
    %v622 = vpop.permute.xlu0 %621
    %623 = vrot.lane.b32.xlu0 %v612, 126
    %v624 = vpop.permute.xlu0 %623
    %v629 = vadd.f32 %v603, %v618
    %v630 = vadd.f32 %v604, %v620
    %v631 = vadd.f32 %v605, %v622
    %v632 = vadd.f32 %v606, %v624
    %s633 = sld [smem:[#allocation12 + $0x3]]
    %v634 = vstv %s633
    %v635 = vmul.f32 %v553, %v634
    %v636 = vmul.f32 %v554, %v634
    %v637 = vmul.f32 %v561, %v634
    %v638 = vmul.f32 %v562, %v634
    %v643 = vrot.slane %v635, 1
    %v644 = vrot.slane %v636, 1
    %v645 = vsel %vm206, %v643, %v644
    %v646 = vrot.slane %v637, 1
    %v647 = vrot.slane %v638, 1
    %v648 = vsel %vm206, %v646, %v647
    %v653 = vadd.f32 %v629, %v645
    %v654 = vadd.f32 %v630, %v644
    %v655 = vadd.f32 %v631, %v648
    %v656 = vadd.f32 %v632, %v647
    %s657 = sld [smem:[#allocation12 + $0x4]]
    %v658 = vstv %s657
    %v659 = vmul.f32 %v553, %v658
    %v660 = vmul.f32 %v554, %v658
    %v661 = vmul.f32 %v561, %v658
    %v662 = vmul.f32 %v562, %v658
    %v667 = vrot.slane %v659, 1
    %v668 = vrot.slane %v660, 1
    %v669 = vsel %vm206, %v667, %v668
    %v670 = vrot.slane %v661, 1
    %v671 = vrot.slane %v662, 1
    %v672 = vsel %vm206, %v670, %v671
    %673 = vrot.lane.b32.xlu0 %v669, 127
    %v674 = vpop.permute.xlu0 %673
    %675 = vrot.lane.b32.xlu0 %v668, 127
    %v676 = vpop.permute.xlu0 %675
    %677 = vrot.lane.b32.xlu0 %v672, 127
    %v678 = vpop.permute.xlu0 %677
    %679 = vrot.lane.b32.xlu0 %v671, 127
    %v680 = vpop.permute.xlu0 %679
    %v685 = vadd.f32 %v653, %v674
    %v686 = vadd.f32 %v654, %v676
    %v687 = vadd.f32 %v655, %v678
    %v688 = vadd.f32 %v656, %v680
    %s689 = sld [smem:[#allocation12 + $0x5]]
    %v690 = vstv %s689
    %v691 = vmul.f32 %v553, %v690
    %v692 = vmul.f32 %v554, %v690
    %v693 = vmul.f32 %v561, %v690
    %v694 = vmul.f32 %v562, %v690
    %v699 = vrot.slane %v691, 1
    %v700 = vrot.slane %v692, 1
    %v701 = vsel %vm206, %v699, %v700
    %v702 = vrot.slane %v693, 1
    %v703 = vrot.slane %v694, 1
    %v704 = vsel %vm206, %v702, %v703
    %705 = vrot.lane.b32.xlu0 %v701, 126
    %v706 = vpop.permute.xlu0 %705
    %707 = vrot.lane.b32.xlu0 %v700, 126
    %v708 = vpop.permute.xlu0 %707
    %709 = vrot.lane.b32.xlu0 %v704, 126
    %v710 = vpop.permute.xlu0 %709
    %711 = vrot.lane.b32.xlu0 %v703, 126
    %v712 = vpop.permute.xlu0 %711
    %v717 = vadd.f32 %v685, %v706
    %v718 = vadd.f32 %v686, %v708
    %v719 = vadd.f32 %v687, %v710
    %v720 = vadd.f32 %v688, %v712
    %s721 = sld [smem:[#allocation12 + $0x6]]
    %v722 = vstv %s721
    %v723 = vmul.f32 %v553, %v722
    %v724 = vmul.f32 %v554, %v722
    %v725 = vmul.f32 %v561, %v722
    %v726 = vmul.f32 %v562, %v722
    %v731 = vrot.slane %v723, 2
    %v732 = vrot.slane %v724, 2
    %v733 = vsel %vm295, %v731, %v732
    %v734 = vrot.slane %v725, 2
    %v735 = vrot.slane %v726, 2
    %v736 = vsel %vm295, %v734, %v735
    %v741 = vadd.f32 %v717, %v733
    %v742 = vadd.f32 %v718, %v732
    %v743 = vadd.f32 %v719, %v736
    %v744 = vadd.f32 %v720, %v735
    %s745 = sld [smem:[#allocation12 + $0x7]]
    %v746 = vstv %s745
    %v747 = vmul.f32 %v553, %v746
    %v748 = vmul.f32 %v554, %v746
    %v749 = vmul.f32 %v561, %v746
    %v750 = vmul.f32 %v562, %v746
    %v755 = vrot.slane %v747, 2
    %v756 = vrot.slane %v748, 2
    %v757 = vsel %vm295, %v755, %v756
    %v758 = vrot.slane %v749, 2
    %v759 = vrot.slane %v750, 2
    %v760 = vsel %vm295, %v758, %v759
    %761 = vrot.lane.b32.xlu0 %v757, 127
    %v762 = vpop.permute.xlu0 %761
    %763 = vrot.lane.b32.xlu0 %v756, 127
    %v764 = vpop.permute.xlu0 %763
    %765 = vrot.lane.b32.xlu0 %v760, 127
    %v766 = vpop.permute.xlu0 %765
    %767 = vrot.lane.b32.xlu0 %v759, 127
    %v768 = vpop.permute.xlu0 %767
    %v773 = vadd.f32 %v741, %v762
    %v774 = vadd.f32 %v742, %v764
    %v775 = vadd.f32 %v743, %v766
    %v776 = vadd.f32 %v744, %v768
    %s777 = sld [smem:[#allocation12 + $0x8]]
    %v778 = vstv %s777
    %v779 = vmul.f32 %v553, %v778
    %v780 = vmul.f32 %v554, %v778
    %v781 = vmul.f32 %v561, %v778
    %v782 = vmul.f32 %v562, %v778
    %v787 = vrot.slane %v779, 2
    %v788 = vrot.slane %v780, 2
    %v789 = vsel %vm295, %v787, %v788
    %v790 = vrot.slane %v781, 2
    %v791 = vrot.slane %v782, 2
    %v792 = vsel %vm295, %v790, %v791
    %793 = vrot.lane.b32.xlu0 %v789, 126
    %v794 = vpop.permute.xlu0 %793
    %795 = vrot.lane.b32.xlu0 %v788, 126
    %v796 = vpop.permute.xlu0 %795
    %797 = vrot.lane.b32.xlu0 %v792, 126
    %v798 = vpop.permute.xlu0 %797
    %799 = vrot.lane.b32.xlu0 %v791, 126
    %v800 = vpop.permute.xlu0 %799
    %v805 = vadd.f32 %v773, %v794
    %v806 = vadd.f32 %v774, %v796
    %v807 = vadd.f32 %v775, %v798
    %v808 = vadd.f32 %v776, %v800
    %s809 = sld [smem:[#allocation14 + $0x1]]
    %v810 = vstv %s809
    %s811 = sld [smem:[#allocation12 + $0x9]]
    %v812 = vstv %s811
    %v813 = vmul.f32 %v555, %v812
    %v814 = vmul.f32 %v556, %v812
    %v815 = vmul.f32 %v563, %v812
    %v816 = vmul.f32 %v564, %v812
    %v817 = vadd.f32 %v810, %v813
    %v818 = vadd.f32 %v810, %v814
    %v819 = vadd.f32 %v810, %v815
    %v820 = vadd.f32 %v810, %v816
    %s821 = sld [smem:[#allocation12 + $0xa]]
    %v822 = vstv %s821
    %v823 = vmul.f32 %v555, %v822
    %v824 = vmul.f32 %v556, %v822
    %v825 = vmul.f32 %v563, %v822
    %v826 = vmul.f32 %v564, %v822
    %831 = vrot.lane.b32.xlu0 %v823, 127
    %v832 = vpop.permute.xlu0 %831
    %833 = vrot.lane.b32.xlu0 %v824, 127
    %v834 = vpop.permute.xlu0 %833
    %835 = vrot.lane.b32.xlu0 %v825, 127
    %v836 = vpop.permute.xlu0 %835
    %837 = vrot.lane.b32.xlu0 %v826, 127
    %v838 = vpop.permute.xlu0 %837
    %v843 = vadd.f32 %v817, %v832
    %v844 = vadd.f32 %v818, %v834
    %v845 = vadd.f32 %v819, %v836
    %v846 = vadd.f32 %v820, %v838
    %s847 = sld [smem:[#allocation12 + $0xb]]
    %v848 = vstv %s847
    %v849 = vmul.f32 %v555, %v848
    %v850 = vmul.f32 %v556, %v848
    %v851 = vmul.f32 %v563, %v848
    %v852 = vmul.f32 %v564, %v848
    %857 = vrot.lane.b32.xlu0 %v849, 126
    %v858 = vpop.permute.xlu0 %857
    %859 = vrot.lane.b32.xlu0 %v850, 126
    %v860 = vpop.permute.xlu0 %859
    %861 = vrot.lane.b32.xlu0 %v851, 126
    %v862 = vpop.permute.xlu0 %861
    %863 = vrot.lane.b32.xlu0 %v852, 126
    %v864 = vpop.permute.xlu0 %863
    %v869 = vadd.f32 %v843, %v858
    %v870 = vadd.f32 %v844, %v860
    %v871 = vadd.f32 %v845, %v862
    %v872 = vadd.f32 %v846, %v864
    %s873 = sld [smem:[#allocation12 + $0xc]]
    %v874 = vstv %s873
    %v875 = vmul.f32 %v555, %v874
    %v876 = vmul.f32 %v556, %v874
    %v877 = vmul.f32 %v563, %v874
    %v878 = vmul.f32 %v564, %v874
    %v883 = vrot.slane %v875, 1
    %v884 = vrot.slane %v876, 1
    %v885 = vsel %vm206, %v883, %v884
    %v886 = vrot.slane %v877, 1
    %v887 = vrot.slane %v878, 1
    %v888 = vsel %vm206, %v886, %v887
    %v893 = vadd.f32 %v869, %v885
    %v894 = vadd.f32 %v870, %v884
    %v895 = vadd.f32 %v871, %v888
    %v896 = vadd.f32 %v872, %v887
    %s897 = sld [smem:[#allocation12 + $0xd]]
    %v898 = vstv %s897
    %v899 = vmul.f32 %v555, %v898
    %v900 = vmul.f32 %v556, %v898
    %v901 = vmul.f32 %v563, %v898
    %v902 = vmul.f32 %v564, %v898
    %v907 = vrot.slane %v899, 1
    %v908 = vrot.slane %v900, 1
    %v909 = vsel %vm206, %v907, %v908
    %v910 = vrot.slane %v901, 1
    %v911 = vrot.slane %v902, 1
    %v912 = vsel %vm206, %v910, %v911
    %913 = vrot.lane.b32.xlu0 %v909, 127
    %v914 = vpop.permute.xlu0 %913
    %915 = vrot.lane.b32.xlu0 %v908, 127
    %v916 = vpop.permute.xlu0 %915
    %917 = vrot.lane.b32.xlu0 %v912, 127
    %v918 = vpop.permute.xlu0 %917
    %919 = vrot.lane.b32.xlu0 %v911, 127
    %v920 = vpop.permute.xlu0 %919
    %v925 = vadd.f32 %v893, %v914
    %v926 = vadd.f32 %v894, %v916
    %v927 = vadd.f32 %v895, %v918
    %v928 = vadd.f32 %v896, %v920
    %s929 = sld [smem:[#allocation12 + $0xe]]
    %v930 = vstv %s929
    %v931 = vmul.f32 %v555, %v930
    %v932 = vmul.f32 %v556, %v930
    %v933 = vmul.f32 %v563, %v930
    %v934 = vmul.f32 %v564, %v930
    %v939 = vrot.slane %v931, 1
    %v940 = vrot.slane %v932, 1
    %v941 = vsel %vm206, %v939, %v940
    %v942 = vrot.slane %v933, 1
    %v943 = vrot.slane %v934, 1
    %v944 = vsel %vm206, %v942, %v943
    %945 = vrot.lane.b32.xlu0 %v941, 126
    %v946 = vpop.permute.xlu0 %945
    %947 = vrot.lane.b32.xlu0 %v940, 126
    %v948 = vpop.permute.xlu0 %947
    %949 = vrot.lane.b32.xlu0 %v944, 126
    %v950 = vpop.permute.xlu0 %949
    %951 = vrot.lane.b32.xlu0 %v943, 126
    %v952 = vpop.permute.xlu0 %951
    %v957 = vadd.f32 %v925, %v946
    %v958 = vadd.f32 %v926, %v948
    %v959 = vadd.f32 %v927, %v950
    %v960 = vadd.f32 %v928, %v952
    %s961 = sld [smem:[#allocation12 + $0xf]]
    %v962 = vstv %s961
    %v963 = vmul.f32 %v555, %v962
    %v964 = vmul.f32 %v556, %v962
    %v965 = vmul.f32 %v563, %v962
    %v966 = vmul.f32 %v564, %v962
    %v971 = vrot.slane %v963, 2
    %v972 = vrot.slane %v964, 2
    %v973 = vsel %vm295, %v971, %v972
    %v974 = vrot.slane %v965, 2
    %v975 = vrot.slane %v966, 2
    %v976 = vsel %vm295, %v974, %v975
    %v981 = vadd.f32 %v957, %v973
    %v982 = vadd.f32 %v958, %v972
    %v983 = vadd.f32 %v959, %v976
    %v984 = vadd.f32 %v960, %v975
    %s985 = sld [smem:[#allocation12 + $0x10]]
    %v986 = vstv %s985
    %v987 = vmul.f32 %v555, %v986
    %v988 = vmul.f32 %v556, %v986
    %v989 = vmul.f32 %v563, %v986
    %v990 = vmul.f32 %v564, %v986
    %v995 = vrot.slane %v987, 2
    %v996 = vrot.slane %v988, 2
    %v997 = vsel %vm295, %v995, %v996
    %v998 = vrot.slane %v989, 2
    %v999 = vrot.slane %v990, 2
    %v1000 = vsel %vm295, %v998, %v999
    %1001 = vrot.lane.b32.xlu0 %v997, 127
    %v1002 = vpop.permute.xlu0 %1001
    %1003 = vrot.lane.b32.xlu0 %v996, 127
    %v1004 = vpop.permute.xlu0 %1003
    %1005 = vrot.lane.b32.xlu0 %v1000, 127
    %v1006 = vpop.permute.xlu0 %1005
    %1007 = vrot.lane.b32.xlu0 %v999, 127
    %v1008 = vpop.permute.xlu0 %1007
    %v1013 = vadd.f32 %v981, %v1002
    %v1014 = vadd.f32 %v982, %v1004
    %v1015 = vadd.f32 %v983, %v1006
    %v1016 = vadd.f32 %v984, %v1008
    %s1017 = sld [smem:[#allocation12 + $0x11]]
    %v1018 = vstv %s1017
    %v1019 = vmul.f32 %v555, %v1018
    %v1020 = vmul.f32 %v556, %v1018
    %v1021 = vmul.f32 %v563, %v1018
    %v1022 = vmul.f32 %v564, %v1018
    %v1027 = vrot.slane %v1019, 2
    %v1028 = vrot.slane %v1020, 2
    %v1029 = vsel %vm295, %v1027, %v1028
    %v1030 = vrot.slane %v1021, 2
    %v1031 = vrot.slane %v1022, 2
    %v1032 = vsel %vm295, %v1030, %v1031
    %1033 = vrot.lane.b32.xlu0 %v1029, 126
    %v1034 = vpop.permute.xlu0 %1033
    %1035 = vrot.lane.b32.xlu0 %v1028, 126
    %v1036 = vpop.permute.xlu0 %1035
    %1037 = vrot.lane.b32.xlu0 %v1032, 126
    %v1038 = vpop.permute.xlu0 %1037
    %1039 = vrot.lane.b32.xlu0 %v1031, 126
    %v1040 = vpop.permute.xlu0 %1039
    %v1045 = vadd.f32 %v1013, %v1034
    %v1046 = vadd.f32 %v1014, %v1036
    %v1047 = vadd.f32 %v1015, %v1038
    %v1048 = vadd.f32 %v1016, %v1040
    %s1049 = sld [smem:[#allocation14 + $0x2]]
    %v1050 = vstv %s1049
    %s1051 = sld [smem:[#allocation12 + $0x12]]
    %v1052 = vstv %s1051
    %v1053 = vmul.f32 %v557, %v1052
    %v1054 = vmul.f32 %v558, %v1052
    %v1055 = vmul.f32 %v565, %v1052
    %v1056 = vmul.f32 %v566, %v1052
    %v1057 = vadd.f32 %v1050, %v1053
    %v1058 = vadd.f32 %v1050, %v1054
    %v1059 = vadd.f32 %v1050, %v1055
    %v1060 = vadd.f32 %v1050, %v1056
    %s1061 = sld [smem:[#allocation12 + $0x13]]
    %v1062 = vstv %s1061
    %v1063 = vmul.f32 %v557, %v1062
    %v1064 = vmul.f32 %v558, %v1062
    %v1065 = vmul.f32 %v565, %v1062
    %v1066 = vmul.f32 %v566, %v1062
    %1071 = vrot.lane.b32.xlu0 %v1063, 127
    %v1072 = vpop.permute.xlu0 %1071
    %1073 = vrot.lane.b32.xlu0 %v1064, 127
    %v1074 = vpop.permute.xlu0 %1073
    %1075 = vrot.lane.b32.xlu0 %v1065, 127
    %v1076 = vpop.permute.xlu0 %1075
    %1077 = vrot.lane.b32.xlu0 %v1066, 127
    %v1078 = vpop.permute.xlu0 %1077
    %v1083 = vadd.f32 %v1057, %v1072
    %v1084 = vadd.f32 %v1058, %v1074
    %v1085 = vadd.f32 %v1059, %v1076
    %v1086 = vadd.f32 %v1060, %v1078
    %s1087 = sld [smem:[#allocation12 + $0x14]]
    %v1088 = vstv %s1087
    %v1089 = vmul.f32 %v557, %v1088
    %v1090 = vmul.f32 %v558, %v1088
    %v1091 = vmul.f32 %v565, %v1088
    %v1092 = vmul.f32 %v566, %v1088
    %1097 = vrot.lane.b32.xlu0 %v1089, 126
    %v1098 = vpop.permute.xlu0 %1097
    %1099 = vrot.lane.b32.xlu0 %v1090, 126
    %v1100 = vpop.permute.xlu0 %1099
    %1101 = vrot.lane.b32.xlu0 %v1091, 126
    %v1102 = vpop.permute.xlu0 %1101
    %1103 = vrot.lane.b32.xlu0 %v1092, 126
    %v1104 = vpop.permute.xlu0 %1103
    %v1109 = vadd.f32 %v1083, %v1098
    %v1110 = vadd.f32 %v1084, %v1100
    %v1111 = vadd.f32 %v1085, %v1102
    %v1112 = vadd.f32 %v1086, %v1104
    %s1113 = sld [smem:[#allocation12 + $0x15]]
    %v1114 = vstv %s1113
    %v1115 = vmul.f32 %v557, %v1114
    %v1116 = vmul.f32 %v558, %v1114
    %v1117 = vmul.f32 %v565, %v1114
    %v1118 = vmul.f32 %v566, %v1114
    %v1123 = vrot.slane %v1115, 1
    %v1124 = vrot.slane %v1116, 1
    %v1125 = vsel %vm206, %v1123, %v1124
    %v1126 = vrot.slane %v1117, 1
    %v1127 = vrot.slane %v1118, 1
    %v1128 = vsel %vm206, %v1126, %v1127
    %v1133 = vadd.f32 %v1109, %v1125
    %v1134 = vadd.f32 %v1110, %v1124
    %v1135 = vadd.f32 %v1111, %v1128
    %v1136 = vadd.f32 %v1112, %v1127
    %s1137 = sld [smem:[#allocation12 + $0x16]]
    %v1138 = vstv %s1137
    %v1139 = vmul.f32 %v557, %v1138
    %v1140 = vmul.f32 %v558, %v1138
    %v1141 = vmul.f32 %v565, %v1138
    %v1142 = vmul.f32 %v566, %v1138
    %v1147 = vrot.slane %v1139, 1
    %v1148 = vrot.slane %v1140, 1
    %v1149 = vsel %vm206, %v1147, %v1148
    %v1150 = vrot.slane %v1141, 1
    %v1151 = vrot.slane %v1142, 1
    %v1152 = vsel %vm206, %v1150, %v1151
    %1153 = vrot.lane.b32.xlu0 %v1149, 127
    %v1154 = vpop.permute.xlu0 %1153
    %1155 = vrot.lane.b32.xlu0 %v1148, 127
    %v1156 = vpop.permute.xlu0 %1155
    %1157 = vrot.lane.b32.xlu0 %v1152, 127
    %v1158 = vpop.permute.xlu0 %1157
    %1159 = vrot.lane.b32.xlu0 %v1151, 127
    %v1160 = vpop.permute.xlu0 %1159
    %v1165 = vadd.f32 %v1133, %v1154
    %v1166 = vadd.f32 %v1134, %v1156
    %v1167 = vadd.f32 %v1135, %v1158
    %v1168 = vadd.f32 %v1136, %v1160
    %s1169 = sld [smem:[#allocation12 + $0x17]]
    %v1170 = vstv %s1169
    %v1171 = vmul.f32 %v557, %v1170
    %v1172 = vmul.f32 %v558, %v1170
    %v1173 = vmul.f32 %v565, %v1170
    %v1174 = vmul.f32 %v566, %v1170
    %v1179 = vrot.slane %v1171, 1
    %v1180 = vrot.slane %v1172, 1
    %v1181 = vsel %vm206, %v1179, %v1180
    %v1182 = vrot.slane %v1173, 1
    %v1183 = vrot.slane %v1174, 1
    %v1184 = vsel %vm206, %v1182, %v1183
    %1185 = vrot.lane.b32.xlu0 %v1181, 126
    %v1186 = vpop.permute.xlu0 %1185
    %1187 = vrot.lane.b32.xlu0 %v1180, 126
    %v1188 = vpop.permute.xlu0 %1187
    %1189 = vrot.lane.b32.xlu0 %v1184, 126
    %v1190 = vpop.permute.xlu0 %1189
    %1191 = vrot.lane.b32.xlu0 %v1183, 126
    %v1192 = vpop.permute.xlu0 %1191
    %v1197 = vadd.f32 %v1165, %v1186
    %v1198 = vadd.f32 %v1166, %v1188
    %v1199 = vadd.f32 %v1167, %v1190
    %v1200 = vadd.f32 %v1168, %v1192
    %s1201 = sld [smem:[#allocation12 + $0x18]]
    %v1202 = vstv %s1201
    %v1203 = vmul.f32 %v557, %v1202
    %v1204 = vmul.f32 %v558, %v1202
    %v1205 = vmul.f32 %v565, %v1202
    %v1206 = vmul.f32 %v566, %v1202
    %v1211 = vrot.slane %v1203, 2
    %v1212 = vrot.slane %v1204, 2
    %v1213 = vsel %vm295, %v1211, %v1212
    %v1214 = vrot.slane %v1205, 2
    %v1215 = vrot.slane %v1206, 2
    %v1216 = vsel %vm295, %v1214, %v1215
    %v1221 = vadd.f32 %v1197, %v1213
    %v1222 = vadd.f32 %v1198, %v1212
    %v1223 = vadd.f32 %v1199, %v1216
    %v1224 = vadd.f32 %v1200, %v1215
    %s1225 = sld [smem:[#allocation12 + $0x19]]
    %v1226 = vstv %s1225
    %v1227 = vmul.f32 %v557, %v1226
    %v1228 = vmul.f32 %v558, %v1226
    %v1229 = vmul.f32 %v565, %v1226
    %v1230 = vmul.f32 %v566, %v1226
    %v1235 = vrot.slane %v1227, 2
    %v1236 = vrot.slane %v1228, 2
    %v1237 = vsel %vm295, %v1235, %v1236
    %v1238 = vrot.slane %v1229, 2
    %v1239 = vrot.slane %v1230, 2
    %v1240 = vsel %vm295, %v1238, %v1239
    %1241 = vrot.lane.b32.xlu0 %v1237, 127
    %v1242 = vpop.permute.xlu0 %1241
    %1243 = vrot.lane.b32.xlu0 %v1236, 127
    %v1244 = vpop.permute.xlu0 %1243
    %1245 = vrot.lane.b32.xlu0 %v1240, 127
    %v1246 = vpop.permute.xlu0 %1245
    %1247 = vrot.lane.b32.xlu0 %v1239, 127
    %v1248 = vpop.permute.xlu0 %1247
    %v1253 = vadd.f32 %v1221, %v1242
    %v1254 = vadd.f32 %v1222, %v1244
    %v1255 = vadd.f32 %v1223, %v1246
    %v1256 = vadd.f32 %v1224, %v1248
    %s1257 = sld [smem:[#allocation12 + $0x1a]]
    %v1258 = vstv %s1257
    %v1259 = vmul.f32 %v557, %v1258
    %v1260 = vmul.f32 %v558, %v1258
    %v1261 = vmul.f32 %v565, %v1258
    %v1262 = vmul.f32 %v566, %v1258
    %v1267 = vrot.slane %v1259, 2
    %v1268 = vrot.slane %v1260, 2
    %v1269 = vsel %vm295, %v1267, %v1268
    %v1270 = vrot.slane %v1261, 2
    %v1271 = vrot.slane %v1262, 2
    %v1272 = vsel %vm295, %v1270, %v1271
    %1273 = vrot.lane.b32.xlu0 %v1269, 126
    %v1274 = vpop.permute.xlu0 %1273
    %1275 = vrot.lane.b32.xlu0 %v1268, 126
    %v1276 = vpop.permute.xlu0 %1275
    %1277 = vrot.lane.b32.xlu0 %v1272, 126
    %v1278 = vpop.permute.xlu0 %1277
    %1279 = vrot.lane.b32.xlu0 %v1271, 126
    %v1280 = vpop.permute.xlu0 %1279
    %v1285 = vadd.f32 %v1253, %v1274
    %v1286 = vadd.f32 %v1254, %v1276
    %v1287 = vadd.f32 %v1255, %v1278
    %v1288 = vadd.f32 %v1256, %v1280
    %s1289 = sld [smem:[#allocation14 + $0x3]]
    %v1290 = vstv %s1289
    %s1291 = sld [smem:[#allocation12 + $0x1b]]
    %v1292 = vstv %s1291
    %v1293 = vmul.f32 %v559, %v1292
    %v1294 = vmul.f32 %v560, %v1292
    %v1295 = vmul.f32 %v567, %v1292
    %v1296 = vmul.f32 %v568, %v1292
    %v1297 = vadd.f32 %v1290, %v1293
    %v1298 = vadd.f32 %v1290, %v1294
    %v1299 = vadd.f32 %v1290, %v1295
    %v1300 = vadd.f32 %v1290, %v1296
    %s1301 = sld [smem:[#allocation12 + $0x1c]]
    %v1302 = vstv %s1301
    %v1303 = vmul.f32 %v559, %v1302
    %v1304 = vmul.f32 %v560, %v1302
    %v1305 = vmul.f32 %v567, %v1302
    %v1306 = vmul.f32 %v568, %v1302
    %1311 = vrot.lane.b32.xlu0 %v1303, 127
    %v1312 = vpop.permute.xlu0 %1311
    %1313 = vrot.lane.b32.xlu0 %v1304, 127
    %v1314 = vpop.permute.xlu0 %1313
    %1315 = vrot.lane.b32.xlu0 %v1305, 127
    %v1316 = vpop.permute.xlu0 %1315
    %1317 = vrot.lane.b32.xlu0 %v1306, 127
    %v1318 = vpop.permute.xlu0 %1317
    %v1323 = vadd.f32 %v1297, %v1312
    %v1324 = vadd.f32 %v1298, %v1314
    %v1325 = vadd.f32 %v1299, %v1316
    %v1326 = vadd.f32 %v1300, %v1318
    %s1327 = sld [smem:[#allocation12 + $0x1d]]
    %v1328 = vstv %s1327
    %v1329 = vmul.f32 %v559, %v1328
    %v1330 = vmul.f32 %v560, %v1328
    %v1331 = vmul.f32 %v567, %v1328
    %v1332 = vmul.f32 %v568, %v1328
    %1337 = vrot.lane.b32.xlu0 %v1329, 126
    %v1338 = vpop.permute.xlu0 %1337
    %1339 = vrot.lane.b32.xlu0 %v1330, 126
    %v1340 = vpop.permute.xlu0 %1339
    %1341 = vrot.lane.b32.xlu0 %v1331, 126
    %v1342 = vpop.permute.xlu0 %1341
    %1343 = vrot.lane.b32.xlu0 %v1332, 126
    %v1344 = vpop.permute.xlu0 %1343
    %v1349 = vadd.f32 %v1323, %v1338
    %v1350 = vadd.f32 %v1324, %v1340
    %v1351 = vadd.f32 %v1325, %v1342
    %v1352 = vadd.f32 %v1326, %v1344
    %s1353 = sld [smem:[#allocation12 + $0x1e]]
    %v1354 = vstv %s1353
    %v1355 = vmul.f32 %v559, %v1354
    %v1356 = vmul.f32 %v560, %v1354
    %v1357 = vmul.f32 %v567, %v1354
    %v1358 = vmul.f32 %v568, %v1354
    %v1363 = vrot.slane %v1355, 1
    %v1364 = vrot.slane %v1356, 1
    %v1365 = vsel %vm206, %v1363, %v1364
    %v1366 = vrot.slane %v1357, 1
    %v1367 = vrot.slane %v1358, 1
    %v1368 = vsel %vm206, %v1366, %v1367
    %v1373 = vadd.f32 %v1349, %v1365
    %v1374 = vadd.f32 %v1350, %v1364
    %v1375 = vadd.f32 %v1351, %v1368
    %v1376 = vadd.f32 %v1352, %v1367
    %s1377 = sld [smem:[#allocation12 + $0x1f]]
    %v1378 = vstv %s1377
    %v1379 = vmul.f32 %v559, %v1378
    %v1380 = vmul.f32 %v560, %v1378
    %v1381 = vmul.f32 %v567, %v1378
    %v1382 = vmul.f32 %v568, %v1378
    %v1387 = vrot.slane %v1379, 1
    %v1388 = vrot.slane %v1380, 1
    %v1389 = vsel %vm206, %v1387, %v1388
    %v1390 = vrot.slane %v1381, 1
    %v1391 = vrot.slane %v1382, 1
    %v1392 = vsel %vm206, %v1390, %v1391
    %1393 = vrot.lane.b32.xlu0 %v1389, 127
    %v1394 = vpop.permute.xlu0 %1393
    %1395 = vrot.lane.b32.xlu0 %v1388, 127
    %v1396 = vpop.permute.xlu0 %1395
    %1397 = vrot.lane.b32.xlu0 %v1392, 127
    %v1398 = vpop.permute.xlu0 %1397
    %1399 = vrot.lane.b32.xlu0 %v1391, 127
    %v1400 = vpop.permute.xlu0 %1399
    %v1405 = vadd.f32 %v1373, %v1394
    %v1406 = vadd.f32 %v1374, %v1396
    %v1407 = vadd.f32 %v1375, %v1398
    %v1408 = vadd.f32 %v1376, %v1400
    %s1409 = sld [smem:[#allocation12 + $0x20]]
    %v1410 = vstv %s1409
    %v1411 = vmul.f32 %v559, %v1410
    %v1412 = vmul.f32 %v560, %v1410
    %v1413 = vmul.f32 %v567, %v1410
    %v1414 = vmul.f32 %v568, %v1410
    %v1419 = vrot.slane %v1411, 1
    %v1420 = vrot.slane %v1412, 1
    %v1421 = vsel %vm206, %v1419, %v1420
    %v1422 = vrot.slane %v1413, 1
    %v1423 = vrot.slane %v1414, 1
    %v1424 = vsel %vm206, %v1422, %v1423
    %1425 = vrot.lane.b32.xlu0 %v1421, 126
    %v1426 = vpop.permute.xlu0 %1425
    %1427 = vrot.lane.b32.xlu0 %v1420, 126
    %v1428 = vpop.permute.xlu0 %1427
    %1429 = vrot.lane.b32.xlu0 %v1424, 126
    %v1430 = vpop.permute.xlu0 %1429
    %1431 = vrot.lane.b32.xlu0 %v1423, 126
    %v1432 = vpop.permute.xlu0 %1431
    %v1437 = vadd.f32 %v1405, %v1426
    %v1438 = vadd.f32 %v1406, %v1428
    %v1439 = vadd.f32 %v1407, %v1430
    %v1440 = vadd.f32 %v1408, %v1432
    %s1441 = sld [smem:[#allocation12 + $0x21]]
    %v1442 = vstv %s1441
    %v1443 = vmul.f32 %v559, %v1442
    %v1444 = vmul.f32 %v560, %v1442
    %v1445 = vmul.f32 %v567, %v1442
    %v1446 = vmul.f32 %v568, %v1442
    %v1451 = vrot.slane %v1443, 2
    %v1452 = vrot.slane %v1444, 2
    %v1453 = vsel %vm295, %v1451, %v1452
    %v1454 = vrot.slane %v1445, 2
    %v1455 = vrot.slane %v1446, 2
    %v1456 = vsel %vm295, %v1454, %v1455
    %v1461 = vadd.f32 %v1437, %v1453
    %v1462 = vadd.f32 %v1438, %v1452
    %v1463 = vadd.f32 %v1439, %v1456
    %v1464 = vadd.f32 %v1440, %v1455
    %s1465 = sld [smem:[#allocation12 + $0x22]]
    %v1466 = vstv %s1465
    %v1467 = vmul.f32 %v559, %v1466
    %v1468 = vmul.f32 %v560, %v1466
    %v1469 = vmul.f32 %v567, %v1466
    %v1470 = vmul.f32 %v568, %v1466
    %v1475 = vrot.slane %v1467, 2
    %v1476 = vrot.slane %v1468, 2
    %v1477 = vsel %vm295, %v1475, %v1476
    %v1478 = vrot.slane %v1469, 2
    %v1479 = vrot.slane %v1470, 2
    %v1480 = vsel %vm295, %v1478, %v1479
    %1481 = vrot.lane.b32.xlu0 %v1477, 127
    %v1482 = vpop.permute.xlu0 %1481
    %1483 = vrot.lane.b32.xlu0 %v1476, 127
    %v1484 = vpop.permute.xlu0 %1483
    %1485 = vrot.lane.b32.xlu0 %v1480, 127
    %v1486 = vpop.permute.xlu0 %1485
    %1487 = vrot.lane.b32.xlu0 %v1479, 127
    %v1488 = vpop.permute.xlu0 %1487
    %v1493 = vadd.f32 %v1461, %v1482
    %v1494 = vadd.f32 %v1462, %v1484
    %v1495 = vadd.f32 %v1463, %v1486
    %v1496 = vadd.f32 %v1464, %v1488
    %s1497 = sld [smem:[#allocation12 + $0x23]]
    %v1498 = vstv %s1497
    %v1499 = vmul.f32 %v559, %v1498
    %v1500 = vmul.f32 %v560, %v1498
    %v1501 = vmul.f32 %v567, %v1498
    %v1502 = vmul.f32 %v568, %v1498
    %v1507 = vrot.slane %v1499, 2
    %v1508 = vrot.slane %v1500, 2
    %v1509 = vsel %vm295, %v1507, %v1508
    %v1510 = vrot.slane %v1501, 2
    %v1511 = vrot.slane %v1502, 2
    %v1512 = vsel %vm295, %v1510, %v1511
    %1513 = vrot.lane.b32.xlu0 %v1509, 126
    %v1514 = vpop.permute.xlu0 %1513
    %1515 = vrot.lane.b32.xlu0 %v1508, 126
    %v1516 = vpop.permute.xlu0 %1515
    %1517 = vrot.lane.b32.xlu0 %v1512, 126
    %v1518 = vpop.permute.xlu0 %1517
    %1519 = vrot.lane.b32.xlu0 %v1511, 126
    %v1520 = vpop.permute.xlu0 %1519
    %v1525 = vadd.f32 %v1493, %v1514
    %v1526 = vadd.f32 %v1494, %v1516
    %v1527 = vadd.f32 %v1495, %v1518
    %v1528 = vadd.f32 %v1496, %v1520
    %s1529 = sld [smem:[#allocation16]]
    %v1530 = vstv %s1529
    %s1531 = sld [smem:[#allocation15]]
    %v1532 = vstv %s1531
    %v1533 = vmul.f32 %v805, %v1532
    %v1534 = vmul.f32 %v806, %v1532
    %v1535 = vmul.f32 %v807, %v1532
    %v1536 = vmul.f32 %v808, %v1532
    %v1537 = vadd.f32 %v1530, %v1533
    %v1538 = vadd.f32 %v1530, %v1534
    %v1539 = vadd.f32 %v1530, %v1535
    %v1540 = vadd.f32 %v1530, %v1536
    %s1541 = sld [smem:[#allocation15 + $0x8]]
    %v1542 = vstv %s1541
    %v1543 = vmul.f32 %v1045, %v1542
    %v1544 = vmul.f32 %v1046, %v1542
    %v1545 = vmul.f32 %v1047, %v1542
    %v1546 = vmul.f32 %v1048, %v1542
    %v1547 = vadd.f32 %v1537, %v1543
    %v1548 = vadd.f32 %v1538, %v1544
    %v1549 = vadd.f32 %v1539, %v1545
    %v1550 = vadd.f32 %v1540, %v1546
    %s1551 = sld [smem:[#allocation15 + $0x10]]
    %v1552 = vstv %s1551
    %v1553 = vmul.f32 %v1285, %v1552
    %v1554 = vmul.f32 %v1286, %v1552
    %v1555 = vmul.f32 %v1287, %v1552
    %v1556 = vmul.f32 %v1288, %v1552
    %v1557 = vadd.f32 %v1547, %v1553
    %v1558 = vadd.f32 %v1548, %v1554
    %v1559 = vadd.f32 %v1549, %v1555
    %v1560 = vadd.f32 %v1550, %v1556
    %s1561 = sld [smem:[#allocation15 + $0x18]]
    %v1562 = vstv %s1561
    %v1563 = vmul.f32 %v1525, %v1562
    %v1564 = vmul.f32 %v1526, %v1562
    %v1565 = vmul.f32 %v1527, %v1562
    %v1566 = vmul.f32 %v1528, %v1562
    %v1567 = vadd.f32 %v1557, %v1563
    %v1568 = vadd.f32 %v1558, %v1564
    %v1569 = vadd.f32 %v1559, %v1565
    %v1570 = vadd.f32 %v1560, %v1566
    %v1571 = vmax.f32 %v1567, 0.0
    %v1572 = vmax.f32 %v1568, 0.0
    %v1573 = vmax.f32 %v1569, 0.0
    %v1574 = vmax.f32 %v1570, 0.0
    %v1575 = vmin.f32 %v1571, 6.0
    %v1576 = vmin.f32 %v1572, 6.0
    %v1577 = vmin.f32 %v1573, 6.0
    %v1578 = vmin.f32 %v1574, 6.0
    %s1579 = sld [smem:[#allocation16 + $0x1]]
    %v1580 = vstv %s1579
    %s1581 = sld [smem:[#allocation15 + $0x1]]
    %v1582 = vstv %s1581
    %v1583 = vmul.f32 %v805, %v1582
    %v1584 = vmul.f32 %v806, %v1582
    %v1585 = vmul.f32 %v807, %v1582
    %v1586 = vmul.f32 %v808, %v1582
    %v1587 = vadd.f32 %v1580, %v1583
    %v1588 = vadd.f32 %v1580, %v1584
    %v1589 = vadd.f32 %v1580, %v1585
    %v1590 = vadd.f32 %v1580, %v1586
    %s1591 = sld [smem:[#allocation15 + $0x9]]
    %v1592 = vstv %s1591
    %v1593 = vmul.f32 %v1045, %v1592
    %v1594 = vmul.f32 %v1046, %v1592
    %v1595 = vmul.f32 %v1047, %v1592
    %v1596 = vmul.f32 %v1048, %v1592
    %v1597 = vadd.f32 %v1587, %v1593
    %v1598 = vadd.f32 %v1588, %v1594
    %v1599 = vadd.f32 %v1589, %v1595
    %v1600 = vadd.f32 %v1590, %v1596
    %s1601 = sld [smem:[#allocation15 + $0x11]]
    %v1602 = vstv %s1601
    %v1603 = vmul.f32 %v1285, %v1602
    %v1604 = vmul.f32 %v1286, %v1602
    %v1605 = vmul.f32 %v1287, %v1602
    %v1606 = vmul.f32 %v1288, %v1602
    %v1607 = vadd.f32 %v1597, %v1603
    %v1608 = vadd.f32 %v1598, %v1604
    %v1609 = vadd.f32 %v1599, %v1605
    %v1610 = vadd.f32 %v1600, %v1606
    %s1611 = sld [smem:[#allocation15 + $0x19]]
    %v1612 = vstv %s1611
    %v1613 = vmul.f32 %v1525, %v1612
    %v1614 = vmul.f32 %v1526, %v1612
    %v1615 = vmul.f32 %v1527, %v1612
    %v1616 = vmul.f32 %v1528, %v1612
    %v1617 = vadd.f32 %v1607, %v1613
    %v1618 = vadd.f32 %v1608, %v1614
    %v1619 = vadd.f32 %v1609, %v1615
    %v1620 = vadd.f32 %v1610, %v1616
    %v1621 = vmax.f32 %v1617, 0.0
    %v1622 = vmax.f32 %v1618, 0.0
    %v1623 = vmax.f32 %v1619, 0.0
    %v1624 = vmax.f32 %v1620, 0.0
    %v1625 = vmin.f32 %v1621, 6.0
    %v1626 = vmin.f32 %v1622, 6.0
    %v1627 = vmin.f32 %v1623, 6.0
    %v1628 = vmin.f32 %v1624, 6.0
    %s1629 = sld [smem:[#allocation16 + $0x2]]
    %v1630 = vstv %s1629
    %s1631 = sld [smem:[#allocation15 + $0x2]]
    %v1632 = vstv %s1631
    %v1633 = vmul.f32 %v805, %v1632
    %v1634 = vmul.f32 %v806, %v1632
    %v1635 = vmul.f32 %v807, %v1632
    %v1636 = vmul.f32 %v808, %v1632
    %v1637 = vadd.f32 %v1630, %v1633
    %v1638 = vadd.f32 %v1630, %v1634
    %v1639 = vadd.f32 %v1630, %v1635
    %v1640 = vadd.f32 %v1630, %v1636
    %s1641 = sld [smem:[#allocation15 + $0xa]]
    %v1642 = vstv %s1641
    %v1643 = vmul.f32 %v1045, %v1642
    %v1644 = vmul.f32 %v1046, %v1642
    %v1645 = vmul.f32 %v1047, %v1642
    %v1646 = vmul.f32 %v1048, %v1642
    %v1647 = vadd.f32 %v1637, %v1643
    %v1648 = vadd.f32 %v1638, %v1644
    %v1649 = vadd.f32 %v1639, %v1645
    %v1650 = vadd.f32 %v1640, %v1646
    %s1651 = sld [smem:[#allocation15 + $0x12]]
    %v1652 = vstv %s1651
    %v1653 = vmul.f32 %v1285, %v1652
    %v1654 = vmul.f32 %v1286, %v1652
    %v1655 = vmul.f32 %v1287, %v1652
    %v1656 = vmul.f32 %v1288, %v1652
    %v1657 = vadd.f32 %v1647, %v1653
    %v1658 = vadd.f32 %v1648, %v1654
    %v1659 = vadd.f32 %v1649, %v1655
    %v1660 = vadd.f32 %v1650, %v1656
    %s1661 = sld [smem:[#allocation15 + $0x1a]]
    %v1662 = vstv %s1661
    %v1663 = vmul.f32 %v1525, %v1662
    %v1664 = vmul.f32 %v1526, %v1662
    %v1665 = vmul.f32 %v1527, %v1662
    %v1666 = vmul.f32 %v1528, %v1662
    %v1667 = vadd.f32 %v1657, %v1663
    %v1668 = vadd.f32 %v1658, %v1664
    %v1669 = vadd.f32 %v1659, %v1665
    %v1670 = vadd.f32 %v1660, %v1666
    %v1671 = vmax.f32 %v1667, 0.0
    %v1672 = vmax.f32 %v1668, 0.0
    %v1673 = vmax.f32 %v1669, 0.0
    %v1674 = vmax.f32 %v1670, 0.0
    %v1675 = vmin.f32 %v1671, 6.0
    %v1676 = vmin.f32 %v1672, 6.0
    %v1677 = vmin.f32 %v1673, 6.0
    %v1678 = vmin.f32 %v1674, 6.0
    %s1679 = sld [smem:[#allocation16 + $0x3]]
    %v1680 = vstv %s1679
    %s1681 = sld [smem:[#allocation15 + $0x3]]
    %v1682 = vstv %s1681
    %v1683 = vmul.f32 %v805, %v1682
    %v1684 = vmul.f32 %v806, %v1682
    %v1685 = vmul.f32 %v807, %v1682
    %v1686 = vmul.f32 %v808, %v1682
    %v1687 = vadd.f32 %v1680, %v1683
    %v1688 = vadd.f32 %v1680, %v1684
    %v1689 = vadd.f32 %v1680, %v1685
    %v1690 = vadd.f32 %v1680, %v1686
    %s1691 = sld [smem:[#allocation15 + $0xb]]
    %v1692 = vstv %s1691
    %v1693 = vmul.f32 %v1045, %v1692
    %v1694 = vmul.f32 %v1046, %v1692
    %v1695 = vmul.f32 %v1047, %v1692
    %v1696 = vmul.f32 %v1048, %v1692
    %v1697 = vadd.f32 %v1687, %v1693
    %v1698 = vadd.f32 %v1688, %v1694
    %v1699 = vadd.f32 %v1689, %v1695
    %v1700 = vadd.f32 %v1690, %v1696
    %s1701 = sld [smem:[#allocation15 + $0x13]]
    %v1702 = vstv %s1701
    %v1703 = vmul.f32 %v1285, %v1702
    %v1704 = vmul.f32 %v1286, %v1702
    %v1705 = vmul.f32 %v1287, %v1702
    %v1706 = vmul.f32 %v1288, %v1702
    %v1707 = vadd.f32 %v1697, %v1703
    %v1708 = vadd.f32 %v1698, %v1704
    %v1709 = vadd.f32 %v1699, %v1705
    %v1710 = vadd.f32 %v1700, %v1706
    %s1711 = sld [smem:[#allocation15 + $0x1b]]
    %v1712 = vstv %s1711
    %v1713 = vmul.f32 %v1525, %v1712
    %v1714 = vmul.f32 %v1526, %v1712
    %v1715 = vmul.f32 %v1527, %v1712
    %v1716 = vmul.f32 %v1528, %v1712
    %v1717 = vadd.f32 %v1707, %v1713
    %v1718 = vadd.f32 %v1708, %v1714
    %v1719 = vadd.f32 %v1709, %v1715
    %v1720 = vadd.f32 %v1710, %v1716
    %v1721 = vmax.f32 %v1717, 0.0
    %v1722 = vmax.f32 %v1718, 0.0
    %v1723 = vmax.f32 %v1719, 0.0
    %v1724 = vmax.f32 %v1720, 0.0
    %v1725 = vmin.f32 %v1721, 6.0
    %v1726 = vmin.f32 %v1722, 6.0
    %v1727 = vmin.f32 %v1723, 6.0
    %v1728 = vmin.f32 %v1724, 6.0
    %s1729 = sld [smem:[#allocation16 + $0x4]]
    %v1730 = vstv %s1729
    %s1731 = sld [smem:[#allocation15 + $0x4]]
    %v1732 = vstv %s1731
    %v1733 = vmul.f32 %v805, %v1732
    %v1734 = vmul.f32 %v806, %v1732
    %v1735 = vmul.f32 %v807, %v1732
    %v1736 = vmul.f32 %v808, %v1732
    %v1737 = vadd.f32 %v1730, %v1733
    %v1738 = vadd.f32 %v1730, %v1734
    %v1739 = vadd.f32 %v1730, %v1735
    %v1740 = vadd.f32 %v1730, %v1736
    %s1741 = sld [smem:[#allocation15 + $0xc]]
    %v1742 = vstv %s1741
    %v1743 = vmul.f32 %v1045, %v1742
    %v1744 = vmul.f32 %v1046, %v1742
    %v1745 = vmul.f32 %v1047, %v1742
    %v1746 = vmul.f32 %v1048, %v1742
    %v1747 = vadd.f32 %v1737, %v1743
    %v1748 = vadd.f32 %v1738, %v1744
    %v1749 = vadd.f32 %v1739, %v1745
    %v1750 = vadd.f32 %v1740, %v1746
    %s1751 = sld [smem:[#allocation15 + $0x14]]
    %v1752 = vstv %s1751
    %v1753 = vmul.f32 %v1285, %v1752
    %v1754 = vmul.f32 %v1286, %v1752
    %v1755 = vmul.f32 %v1287, %v1752
    %v1756 = vmul.f32 %v1288, %v1752
    %v1757 = vadd.f32 %v1747, %v1753
    %v1758 = vadd.f32 %v1748, %v1754
    %v1759 = vadd.f32 %v1749, %v1755
    %v1760 = vadd.f32 %v1750, %v1756
    %s1761 = sld [smem:[#allocation15 + $0x1c]]
    %v1762 = vstv %s1761
    %v1763 = vmul.f32 %v1525, %v1762
    %v1764 = vmul.f32 %v1526, %v1762
    %v1765 = vmul.f32 %v1527, %v1762
    %v1766 = vmul.f32 %v1528, %v1762
    %v1767 = vadd.f32 %v1757, %v1763
    %v1768 = vadd.f32 %v1758, %v1764
    %v1769 = vadd.f32 %v1759, %v1765
    %v1770 = vadd.f32 %v1760, %v1766
    %v1771 = vmax.f32 %v1767, 0.0
    %v1772 = vmax.f32 %v1768, 0.0
    %v1773 = vmax.f32 %v1769, 0.0
    %v1774 = vmax.f32 %v1770, 0.0
    %v1775 = vmin.f32 %v1771, 6.0
    %v1776 = vmin.f32 %v1772, 6.0
    %v1777 = vmin.f32 %v1773, 6.0
    %v1778 = vmin.f32 %v1774, 6.0
    %s1779 = sld [smem:[#allocation16 + $0x5]]
    %v1780 = vstv %s1779
    %s1781 = sld [smem:[#allocation15 + $0x5]]
    %v1782 = vstv %s1781
    %v1783 = vmul.f32 %v805, %v1782
    %v1784 = vmul.f32 %v806, %v1782
    %v1785 = vmul.f32 %v807, %v1782
    %v1786 = vmul.f32 %v808, %v1782
    %v1787 = vadd.f32 %v1780, %v1783
    %v1788 = vadd.f32 %v1780, %v1784
    %v1789 = vadd.f32 %v1780, %v1785
    %v1790 = vadd.f32 %v1780, %v1786
    %s1791 = sld [smem:[#allocation15 + $0xd]]
    %v1792 = vstv %s1791
    %v1793 = vmul.f32 %v1045, %v1792
    %v1794 = vmul.f32 %v1046, %v1792
    %v1795 = vmul.f32 %v1047, %v1792
    %v1796 = vmul.f32 %v1048, %v1792
    %v1797 = vadd.f32 %v1787, %v1793
    %v1798 = vadd.f32 %v1788, %v1794
    %v1799 = vadd.f32 %v1789, %v1795
    %v1800 = vadd.f32 %v1790, %v1796
    %s1801 = sld [smem:[#allocation15 + $0x15]]
    %v1802 = vstv %s1801
    %v1803 = vmul.f32 %v1285, %v1802
    %v1804 = vmul.f32 %v1286, %v1802
    %v1805 = vmul.f32 %v1287, %v1802
    %v1806 = vmul.f32 %v1288, %v1802
    %v1807 = vadd.f32 %v1797, %v1803
    %v1808 = vadd.f32 %v1798, %v1804
    %v1809 = vadd.f32 %v1799, %v1805
    %v1810 = vadd.f32 %v1800, %v1806
    %s1811 = sld [smem:[#allocation15 + $0x1d]]
    %v1812 = vstv %s1811
    %v1813 = vmul.f32 %v1525, %v1812
    %v1814 = vmul.f32 %v1526, %v1812
    %v1815 = vmul.f32 %v1527, %v1812
    %v1816 = vmul.f32 %v1528, %v1812
    %v1817 = vadd.f32 %v1807, %v1813
    %v1818 = vadd.f32 %v1808, %v1814
    %v1819 = vadd.f32 %v1809, %v1815
    %v1820 = vadd.f32 %v1810, %v1816
    %v1821 = vmax.f32 %v1817, 0.0
    %v1822 = vmax.f32 %v1818, 0.0
    %v1823 = vmax.f32 %v1819, 0.0
    %v1824 = vmax.f32 %v1820, 0.0
    %v1825 = vmin.f32 %v1821, 6.0
    %v1826 = vmin.f32 %v1822, 6.0
    %v1827 = vmin.f32 %v1823, 6.0
    %v1828 = vmin.f32 %v1824, 6.0
    %s1829 = sld [smem:[#allocation16 + $0x6]]
    %v1830 = vstv %s1829
    %s1831 = sld [smem:[#allocation15 + $0x6]]
    %v1832 = vstv %s1831
    %v1833 = vmul.f32 %v805, %v1832
    %v1834 = vmul.f32 %v806, %v1832
    %v1835 = vmul.f32 %v807, %v1832
    %v1836 = vmul.f32 %v808, %v1832
    %v1837 = vadd.f32 %v1830, %v1833
    %v1838 = vadd.f32 %v1830, %v1834
    %v1839 = vadd.f32 %v1830, %v1835
    %v1840 = vadd.f32 %v1830, %v1836
    %s1841 = sld [smem:[#allocation15 + $0xe]]
    %v1842 = vstv %s1841
    %v1843 = vmul.f32 %v1045, %v1842
    %v1844 = vmul.f32 %v1046, %v1842
    %v1845 = vmul.f32 %v1047, %v1842
    %v1846 = vmul.f32 %v1048, %v1842
    %v1847 = vadd.f32 %v1837, %v1843
    %v1848 = vadd.f32 %v1838, %v1844
    %v1849 = vadd.f32 %v1839, %v1845
    %v1850 = vadd.f32 %v1840, %v1846
    %s1851 = sld [smem:[#allocation15 + $0x16]]
    %v1852 = vstv %s1851
    %v1853 = vmul.f32 %v1285, %v1852
    %v1854 = vmul.f32 %v1286, %v1852
    %v1855 = vmul.f32 %v1287, %v1852
    %v1856 = vmul.f32 %v1288, %v1852
    %v1857 = vadd.f32 %v1847, %v1853
    %v1858 = vadd.f32 %v1848, %v1854
    %v1859 = vadd.f32 %v1849, %v1855
    %v1860 = vadd.f32 %v1850, %v1856
    %s1861 = sld [smem:[#allocation15 + $0x1e]]
    %v1862 = vstv %s1861
    %v1863 = vmul.f32 %v1525, %v1862
    %v1864 = vmul.f32 %v1526, %v1862
    %v1865 = vmul.f32 %v1527, %v1862
    %v1866 = vmul.f32 %v1528, %v1862
    %v1867 = vadd.f32 %v1857, %v1863
    %v1868 = vadd.f32 %v1858, %v1864
    %v1869 = vadd.f32 %v1859, %v1865
    %v1870 = vadd.f32 %v1860, %v1866
    %v1871 = vmax.f32 %v1867, 0.0
    %v1872 = vmax.f32 %v1868, 0.0
    %v1873 = vmax.f32 %v1869, 0.0
    %v1874 = vmax.f32 %v1870, 0.0
    %v1875 = vmin.f32 %v1871, 6.0
    %v1876 = vmin.f32 %v1872, 6.0
    %v1877 = vmin.f32 %v1873, 6.0
    %v1878 = vmin.f32 %v1874, 6.0
    %s1879 = sld [smem:[#allocation16 + $0x7]]
    %v1880 = vstv %s1879
    %s1881 = sld [smem:[#allocation15 + $0x7]]
    %v1882 = vstv %s1881
    %v1883 = vmul.f32 %v805, %v1882
    %v1884 = vmul.f32 %v806, %v1882
    %v1885 = vmul.f32 %v807, %v1882
    %v1886 = vmul.f32 %v808, %v1882
    %v1887 = vadd.f32 %v1880, %v1883
    %v1888 = vadd.f32 %v1880, %v1884
    %v1889 = vadd.f32 %v1880, %v1885
    %v1890 = vadd.f32 %v1880, %v1886
    %s1891 = sld [smem:[#allocation15 + $0xf]]
    %v1892 = vstv %s1891
    %v1893 = vmul.f32 %v1045, %v1892
    %v1894 = vmul.f32 %v1046, %v1892
    %v1895 = vmul.f32 %v1047, %v1892
    %v1896 = vmul.f32 %v1048, %v1892
    %v1897 = vadd.f32 %v1887, %v1893
    %v1898 = vadd.f32 %v1888, %v1894
    %v1899 = vadd.f32 %v1889, %v1895
    %v1900 = vadd.f32 %v1890, %v1896
    %s1901 = sld [smem:[#allocation15 + $0x17]]
    %v1902 = vstv %s1901
    %v1903 = vmul.f32 %v1285, %v1902
    %v1904 = vmul.f32 %v1286, %v1902
    %v1905 = vmul.f32 %v1287, %v1902
    %v1906 = vmul.f32 %v1288, %v1902
    %v1907 = vadd.f32 %v1897, %v1903
    %v1908 = vadd.f32 %v1898, %v1904
    %v1909 = vadd.f32 %v1899, %v1905
    %v1910 = vadd.f32 %v1900, %v1906
    %s1911 = sld [smem:[#allocation15 + $0x1f]]
    %v1912 = vstv %s1911
    %v1913 = vmul.f32 %v1525, %v1912
    %v1914 = vmul.f32 %v1526, %v1912
    %v1915 = vmul.f32 %v1527, %v1912
    %v1916 = vmul.f32 %v1528, %v1912
    %v1917 = vadd.f32 %v1907, %v1913
    %v1918 = vadd.f32 %v1908, %v1914
    %v1919 = vadd.f32 %v1909, %v1915
    %v1920 = vadd.f32 %v1910, %v1916
    %v1921 = vmax.f32 %v1917, 0.0
    %v1922 = vmax.f32 %v1918, 0.0
    %v1923 = vmax.f32 %v1919, 0.0
    %v1924 = vmax.f32 %v1920, 0.0
    %v1925 = vmin.f32 %v1921, 6.0
    %v1926 = vmin.f32 %v1922, 6.0
    %v1927 = vmin.f32 %v1923, 6.0
    %v1928 = vmin.f32 %v1924, 6.0
    %vm1929 = vcmask 113664
    %1930 = vst.msk [vmem:[%s9] sm:$0xff] %vm1929, %v1575
    %vm1931 = vcmask 111616
    %1932 = vst.msk [vmem:[%s9 + $0x8] sm:$0x3f] %vm1931, %v1576
    %1933 = vst.msk [vmem:[%s9 + $0x10] sm:$0xff] %vm1929, %v1625
    %1934 = vst.msk [vmem:[%s9 + $0x18] sm:$0x3f] %vm1931, %v1626
    %1935 = vst.msk [vmem:[%s9 + $0x20] sm:$0xff] %vm1929, %v1675
    %1936 = vst.msk [vmem:[%s9 + $0x28] sm:$0x3f] %vm1931, %v1676
    %1937 = vst.msk [vmem:[%s9 + $0x30] sm:$0xff] %vm1929, %v1725
    %1938 = vst.msk [vmem:[%s9 + $0x38] sm:$0x3f] %vm1931, %v1726
    %1939 = vst.msk [vmem:[%s9 + $0x40] sm:$0xff] %vm1929, %v1775
    %1940 = vst.msk [vmem:[%s9 + $0x48] sm:$0x3f] %vm1931, %v1776
    %1941 = vst.msk [vmem:[%s9 + $0x50] sm:$0xff] %vm1929, %v1825
    %1942 = vst.msk [vmem:[%s9 + $0x58] sm:$0x3f] %vm1931, %v1826
    %1943 = vst.msk [vmem:[%s9 + $0x60] sm:$0xff] %vm1929, %v1875
    %1944 = vst.msk [vmem:[%s9 + $0x68] sm:$0x3f] %vm1931, %v1876
    %1945 = vst.msk [vmem:[%s9 + $0x70] sm:$0xff] %vm1929, %v1925
    %1946 = vst.msk [vmem:[%s9 + $0x78] sm:$0x3f] %vm1931, %v1926
    %1947 = vst.msk [vmem:[%s9 + $0x80] sm:$0xff] %vm1929, %v1577
    %1948 = vst.msk [vmem:[%s9 + $0x88] sm:$0x3f] %vm1931, %v1578
    %1949 = vst.msk [vmem:[%s9 + $0x90] sm:$0xff] %vm1929, %v1627
    %1950 = vst.msk [vmem:[%s9 + $0x98] sm:$0x3f] %vm1931, %v1628
    %1951 = vst.msk [vmem:[%s9 + $0xa0] sm:$0xff] %vm1929, %v1677
    %1952 = vst.msk [vmem:[%s9 + $0xa8] sm:$0x3f] %vm1931, %v1678
    %1953 = vst.msk [vmem:[%s9 + $0xb0] sm:$0xff] %vm1929, %v1727
    %1954 = vst.msk [vmem:[%s9 + $0xb8] sm:$0x3f] %vm1931, %v1728
    %1955 = vst.msk [vmem:[%s9 + $0xc0] sm:$0xff] %vm1929, %v1777
    %1956 = vst.msk [vmem:[%s9 + $0xc8] sm:$0x3f] %vm1931, %v1778
    %1957 = vst.msk [vmem:[%s9 + $0xd0] sm:$0xff] %vm1929, %v1827
    %1958 = vst.msk [vmem:[%s9 + $0xd8] sm:$0x3f] %vm1931, %v1828
    %1959 = vst.msk [vmem:[%s9 + $0xe0] sm:$0xff] %vm1929, %v1877
    %1960 = vst.msk [vmem:[%s9 + $0xe8] sm:$0x3f] %vm1931, %v1878
    %1961 = vst.msk [vmem:[%s9 + $0xf0] sm:$0xff] %vm1929, %v1927
    %1962 = vst.msk [vmem:[%s9 + $0xf8] sm:$0x3f] %vm1931, %v1928
    // Predicated region
    $region70: #{simple_cnn_forward.1} parent=1 // pred_check
      _
    $region71: #{simple_cnn_forward.1} parent=1 // pred_check_branch
      %1964 = sbr.rel (0) target = $region73
    $region72: #{simple_cnn_forward.1} parent=1 // pred_region
      _
    $region73: #{simple_cnn_forward.1} parent=1 // pred_fallthru
      _
    // Predicated region
    $region74: #{simple_cnn_forward.1} parent=1 // pred_check
      _
    $region75: #{simple_cnn_forward.1} parent=1 // pred_check_branch
      %1966 = sbr.rel (0) target = $region77
    $region76: #{simple_cnn_forward.1} parent=1 // pred_region
      _
    $region77: #{simple_cnn_forward.1} parent=1 // pred_fallthru
      _
    %1967 = vsyncpa [#allocation5], 1
    %1968 = vsyncpa [#allocation6], 1
    %1969 = vsyncpa [#allocation7], 1
    %1970 = vsyncpa [#allocation10], 1
    %1971 = vsyncpa [#allocation13], 1
    %1972 = vsyncpa [#allocation17], 1

</llo_original>
